<compile_context>
chip_gen: v7x
topology: tpu7x:2x2x1
jax: 0.10.0
libtpu: 0.0.40
codegen_flags: <defaults>
</compile_context>

<pallas_src>
import functools
import math

import jax
import jax.numpy as jnp
from jax.experimental import pallas as pl
from jax.experimental.pallas import tpu as pltpu

LN_EPS = 1e-12                     # BERT LayerNorm epsilon
VMEM_LIMIT = 48 * 1024 * 1024      # leave headroom on v7x's 64 MiB VMEM


def _gelu(x):
    # TODO(synk): BERT's reference gelu is erf-based; we use the tanh approximation
    # ("gelu_new") because tanh lowers cleanly to the TPU EUP (~1e-3 difference).
    c = math.sqrt(2.0 / math.pi)
    return 0.5 * x * (1.0 + jnp.tanh(c * (x + 0.044715 * x * x * x)))


def _layernorm(h, g, b):
    mu = jnp.mean(h, axis=-1, keepdims=True)
    var = jnp.mean(jnp.square(h - mu), axis=-1, keepdims=True)
    return (h - mu) * jax.lax.rsqrt(var + LN_EPS) * g + b


# ---------------- Pallas kernels ----------------

def _ffn_kernel(x_ref, wi_ref, bi_ref, wo_ref, bo_ref, g_ref, beta_ref, o_ref, acc_ref):
    # out = LayerNorm(gelu(x @ Wi + bi) @ Wo + bo + x), tiled over the intermediate (K) dim.
    k = pl.program_id(1)

    @pl.when(k == 0)
    def _():
        acc_ref[...] = jnp.zeros_like(acc_ref)

    x_bf = x_ref[...].astype(jnp.bfloat16)
    inter = jnp.dot(x_bf, wi_ref[...], preferred_element_type=jnp.float32)
    inter = _gelu(inter + bi_ref[...])                       # gelu is elementwise over I -> exact per-slab
    acc_ref[...] += jnp.dot(inter.astype(jnp.bfloat16), wo_ref[...],
                            preferred_element_type=jnp.float32)

    @pl.when(k == pl.num_programs(1) - 1)
    def _():
        h = acc_ref[...] + bo_ref[...] + x_ref[...].astype(jnp.float32)
        o_ref[...] = _layernorm(h, g_ref[...], beta_ref[...]).astype(o_ref.dtype)


def _attn_block_kernel(x_ref, m_ref, wq_ref, bq_ref, wk_ref, bk_ref, wv_ref, bv_ref,
                       wo_ref, bo_ref, g_ref, beta_ref, o_ref, acc_ref, *, head_dim):
    # One (batch, head) step: project this head's Q/K/V, do softmax attention, and accumulate
    # this head's slice of the output projection; residual + LayerNorm on the last head.
    # TODO(synk): for long sequences convert to a flash-style KV-block loop (online softmax)
    #             and add a parallel query-block grid axis for v7x's 2 TensorCores.
    h = pl.program_id(1)

    @pl.when(h == 0)
    def _():
        acc_ref[...] = jnp.zeros_like(acc_ref)

    x_bf = x_ref[0].astype(jnp.bfloat16)                     # [S, H]
    m = m_ref[0]                                             # [1, S] additive key mask

    q = jnp.dot(x_bf, wq_ref[0], preferred_element_type=jnp.float32) + bq_ref[0]
    k = jnp.dot(x_bf, wk_ref[0], preferred_element_type=jnp.float32) + bk_ref[0]
    v = jnp.dot(x_bf, wv_ref[0], preferred_element_type=jnp.float32) + bv_ref[0]

    # scores = q @ k^T without materializing a transpose (contract last dims on the MXU).
    sc = jax.lax.dot_general(q.astype(jnp.bfloat16), k.astype(jnp.bfloat16),
                             (((1,), (1,)), ((), ())),
                             preferred_element_type=jnp.float32)
    sc = sc * (1.0 / math.sqrt(head_dim)) + m
    sc = sc - jnp.max(sc, axis=-1, keepdims=True)
    p = jnp.exp(sc)
    p = p * pl.reciprocal(jnp.sum(p, axis=-1, keepdims=True), approx=True)

    ctx = jnp.dot(p.astype(jnp.bfloat16), v.astype(jnp.bfloat16),
                  preferred_element_type=jnp.float32)        # [S, head_dim]
    # this head's slice of the output projection: ctx_h @ Wo[h*dh:(h+1)*dh, :]
    acc_ref[...] += jnp.dot(ctx.astype(jnp.bfloat16), wo_ref[0],
                            preferred_element_type=jnp.float32)

    @pl.when(h == pl.num_programs(1) - 1)
    def _():
        res = acc_ref[...] + bo_ref[...] + x_ref[0].astype(jnp.float32)
        o_ref[0] = _layernorm(res, g_ref[...], beta_ref[...]).astype(o_ref.dtype)


# ---------------- Pallas wrappers ----------------

def fused_ffn(x2, wi, bi, wo, bo, gamma, beta, *, tm=256, tki=512):
    """LayerNorm(gelu(x2 @ wi + bi) @ wo + bo + x2) as a single tiled pallas_call."""
    M, H = x2.shape
    I = wi.shape[1]
    tm = min(tm, M)
    tki = min(tki, I)
    if I % tki != 0:
        tki = I  # TODO(synk): ragged reduction tiles need masking; fall back to full-I slab.
    grid = (pl.cdiv(M, tm), I // tki)
    return pl.pallas_call(
        _ffn_kernel,
        grid=grid,
        in_specs=[
            pl.BlockSpec((tm, H), lambda i, k: (i, 0)),       # x tile (also the residual)
            pl.BlockSpec((H, tki), lambda i, k: (0, k)),      # Wi slab (bf16)
            pl.BlockSpec((1, tki), lambda i, k: (0, k)),      # bi slab
            pl.BlockSpec((tki, H), lambda i, k: (k, 0)),      # Wo slab (bf16)
            pl.BlockSpec((1, H), lambda i, k: (0, 0)),        # bo
            pl.BlockSpec((1, H), lambda i, k: (0, 0)),        # gamma
            pl.BlockSpec((1, H), lambda i, k: (0, 0)),        # beta
        ],
        out_specs=pl.BlockSpec((tm, H), lambda i, k: (i, 0)),
        out_shape=jax.ShapeDtypeStruct((M, H), x2.dtype),
        scratch_shapes=[pltpu.VMEM((tm, H), jnp.float32)],
        compiler_params=pltpu.CompilerParams(
            dimension_semantics=("parallel", "arbitrary"),
            vmem_limit_bytes=VMEM_LIMIT),
    )(x2,
      wi.astype(jnp.bfloat16), bi.reshape(1, -1),
      wo.astype(jnp.bfloat16), bo.reshape(1, -1),
      gamma.reshape(1, -1), beta.reshape(1, -1))


def attention_block(x, mask, wq, bq, wk, bk, wv, bv, wo, bo, gamma, beta, num_heads):
    """LayerNorm(MHSA(x, mask) @ wo + bo + x) as one pallas_call over (batch, heads)."""
    B, S, H = x.shape
    dh = H // num_heads

    # Host-side head-major weight layout so per-head slicing is done by the BlockSpec DMA.
    # (In production these would be pre-packed once, not per call.)
    def in_heads(w):                    # [H, H] -> [heads, H, dh]  (columns h*dh:(h+1)*dh)
        return jnp.transpose(w.reshape(H, num_heads, dh), (1, 0, 2)).astype(jnp.bfloat16)

    wqh, wkh, wvh = in_heads(wq), in_heads(wk), in_heads(wv)
    woh = wo.reshape(num_heads, dh, H).astype(jnp.bfloat16)   # rows h*dh:(h+1)*dh of Wo
    bqh = bq.reshape(num_heads, 1, dh)
    bkh = bk.reshape(num_heads, 1, dh)
    bvh = bv.reshape(num_heads, 1, dh)
    mask3 = mask.reshape(B, 1, S).astype(jnp.float32)

    w_in = pl.BlockSpec((1, H, dh), lambda b, h: (h, 0, 0))
    b_in = pl.BlockSpec((1, 1, dh), lambda b, h: (h, 0, 0))
    w_out = pl.BlockSpec((1, dh, H), lambda b, h: (h, 0, 0))
    vec = pl.BlockSpec((1, H), lambda b, h: (0, 0))

    return pl.pallas_call(
        functools.partial(_attn_block_kernel, head_dim=dh),
        grid=(B, num_heads),
        in_specs=[
            pl.BlockSpec((1, S, H), lambda b, h: (b, 0, 0)),  # x (resident across heads)
            pl.BlockSpec((1, 1, S), lambda b, h: (b, 0, 0)),  # additive key mask
            w_in, b_in, w_in, b_in, w_in, b_in,               # per-head Q/K/V weights + biases
            w_out, vec, vec, vec,                             # per-head Wo slab, bo, gamma, beta
        ],
        out_specs=pl.BlockSpec((1, S, H), lambda b, h: (b, 0, 0)),
        out_shape=jax.ShapeDtypeStruct((B, S, H), x.dtype),
        scratch_shapes=[pltpu.VMEM((S, H), jnp.float32)],
        compiler_params=pltpu.CompilerParams(
            dimension_semantics=("parallel", "arbitrary"),
            vmem_limit_bytes=VMEM_LIMIT),
    )(x, mask3, wqh, bqh, wkh, bkh, wvh, bvh, woh,
      bo.reshape(1, -1), gamma.reshape(1, -1), beta.reshape(1, -1))


# ---------------- CombineLayer forward ----------------

def combine_layer_forward(x, mask, params, num_heads):
    B, S, H = x.shape
    x2 = x.reshape(B * S, H)

    # self.medium(input) + self.outputlayer(output, input): fused Intermediate + Output
    out = fused_ffn(x2, params["medium_w"], params["medium_b"],
                    params["out_w"], params["out_b"],
                    params["out_g"], params["out_beta"]).reshape(B, S, H)

    # self.others: full BertLayers applied as layer(output, mask)[0]
    for lp in params["others"]:
        attn = attention_block(out, mask, lp["wq"], lp["bq"], lp["wk"], lp["bk"],
                               lp["wv"], lp["bv"], lp["wo"], lp["bo"],
                               lp["ln1_g"], lp["ln1_b"], num_heads)
        out = fused_ffn(attn.reshape(B * S, H), lp["wi"], lp["bi"],
                        lp["wo2"], lp["bo2"], lp["ln2_g"], lp["ln2_b"]).reshape(B, S, H)
    return out


# ---------------- pure-JAX reference (f32) ----------------

def _ref_forward(x, mask, params, num_heads):
    B, S, H = x.shape
    dh = H // num_heads

    def ffn(h2, wi, bi, wo, bo, g, beta):
        inter = _gelu(h2 @ wi + bi)
        return _layernorm(inter @ wo + bo + h2, g, beta)

    out = ffn(x.reshape(B * S, H), params["medium_w"], params["medium_b"],
              params["out_w"], params["out_b"], params["out_g"],
              params["out_beta"]).reshape(B, S, H)
    for lp in params["others"]:
        q = out @ lp["wq"] + lp["bq"]
        k = out @ lp["wk"] + lp["bk"]
        v = out @ lp["wv"] + lp["bv"]
        split = lambda t: t.reshape(B, S, num_heads, dh).transpose(0, 2, 1, 3)
        qh, kh, vh = split(q), split(k), split(v)
        sc = jnp.einsum("bhqd,bhkd->bhqk", qh, kh) / math.sqrt(dh) + mask[:, None, None, :]
        p = jax.nn.softmax(sc, axis=-1)
        ctx = jnp.einsum("bhqk,bhkd->bhqd", p, vh).transpose(0, 2, 1, 3).reshape(B * S, H)
        attn = _layernorm(ctx @ lp["wo"] + lp["bo"] + out.reshape(B * S, H),
                          lp["ln1_g"], lp["ln1_b"])
        out = ffn(attn, lp["wi"], lp["bi"], lp["wo2"], lp["bo2"],
                  lp["ln2_g"], lp["ln2_b"]).reshape(B, S, H)
    return out


# ---------------- deterministic parameter init ----------------

def init_params(key, hidden, intermediate, num_layers):
    def dense(k, din, dout):
        w = jax.random.normal(k, (din, dout), jnp.float32) * 0.02
        b = jnp.zeros((dout,), jnp.float32)
        return w, b

    keys = jax.random.split(key, 2 + num_layers)
    params = {}
    params["medium_w"], params["medium_b"] = dense(keys[0], hidden, intermediate)
    params["out_w"], params["out_b"] = dense(keys[1], intermediate, hidden)
    params["out_g"] = jnp.ones((hidden,), jnp.float32)
    params["out_beta"] = jnp.zeros((hidden,), jnp.float32)

    layers = []
    for i in range(num_layers):
        ks = jax.random.split(keys[2 + i], 6)
        lp = {}
        lp["wq"], lp["bq"] = dense(ks[0], hidden, hidden)
        lp["wk"], lp["bk"] = dense(ks[1], hidden, hidden)
        lp["wv"], lp["bv"] = dense(ks[2], hidden, hidden)
        lp["wo"], lp["bo"] = dense(ks[3], hidden, hidden)
        lp["ln1_g"] = jnp.ones((hidden,), jnp.float32)
        lp["ln1_b"] = jnp.zeros((hidden,), jnp.float32)
        lp["wi"], lp["bi"] = dense(ks[4], hidden, intermediate)
        lp["wo2"], lp["bo2"] = dense(ks[5], intermediate, hidden)
        lp["ln2_g"] = jnp.ones((hidden,), jnp.float32)
        lp["ln2_b"] = jnp.zeros((hidden,), jnp.float32)
        layers.append(lp)
    params["others"] = layers
    return params


if __name__ == "__main__":
    B, S, H, I, NH, NL = 2, 8, 32, 64, 4, 2
    key = jax.random.PRNGKey(0)
    kx, kp = jax.random.split(key)

    x = jax.random.normal(kx, (B, S, H), jnp.float32)
    # additive attention mask: 0.0 = attend, -1e9 = masked (pad last 2 tokens of batch 1)
    mask = jnp.zeros((B, S), jnp.float32)
    mask = mask.at[1, S - 2:].set(-1e9)

    params = init_params(kp, H, I, NL)

    fwd = jax.jit(combine_layer_forward, static_argnums=(3,))
    out = fwd(x, mask, params, NH)
    jax.block_until_ready(out)
    assert out.shape == (B, S, H) and out.dtype == jnp.float32

    ref = _ref_forward(x, mask, params, NH)
    # bf16 matmuls + approx reciprocal -> loose tolerance
    assert bool(jnp.allclose(out, ref, atol=1e-1, rtol=1e-1)), float(jnp.max(jnp.abs(out - ref)))
    print("KERNEL_OK")
</pallas_src>

<mosaic_0001>
module attributes {stable_mosaic.version = 11 : i64} {
  func.func @_ffn_kernel(%arg0: i32, %arg1: i32, %arg2: memref<16x32xf32, #tpu.memory_space<vmem>>, %arg3: memref<32x64xbf16, #tpu.memory_space<vmem>>, %arg4: memref<1x64xf32, #tpu.memory_space<vmem>>, %arg5: memref<64x32xbf16, #tpu.memory_space<vmem>>, %arg6: memref<1x32xf32, #tpu.memory_space<vmem>>, %arg7: memref<1x32xf32, #tpu.memory_space<vmem>>, %arg8: memref<1x32xf32, #tpu.memory_space<vmem>>, %arg9: memref<16x32xf32, #tpu.memory_space<vmem>>, %arg10: memref<16x32xf32, #tpu.memory_space<vmem>>) attributes {dimension_semantics = [#tpu.dimension_semantics<parallel>, #tpu.dimension_semantics<arbitrary>], iteration_bounds = array<i64: 1, 1>, scalar_prefetch = 0 : i64, scratch_operands = 1 : i64, tpu.core_type = #tpu.core_type<tc>, window_params = [{transform_indices = @transform_0, window_bounds = array<i64: 16, 32>}, {transform_indices = @transform_1, window_bounds = array<i64: 32, 64>}, {transform_indices = @transform_2, window_bounds = array<i64: 1, 64>}, {transform_indices = @transform_3, window_bounds = array<i64: 64, 32>}, {pipeline_mode = #tpu.pipeline_mode<synchronous>, transform_indices = @transform_4, window_bounds = array<i64: 1, 32>}, {pipeline_mode = #tpu.pipeline_mode<synchronous>, transform_indices = @transform_5, window_bounds = array<i64: 1, 32>}, {pipeline_mode = #tpu.pipeline_mode<synchronous>, transform_indices = @transform_6, window_bounds = array<i64: 1, 32>}, {transform_indices = @transform_7, window_bounds = array<i64: 16, 32>}]} {
    %c0_i32 = arith.constant 0 : i32
    %0 = arith.cmpi eq, %arg1, %c0_i32 : i32
    %1 = arith.extui %0 : i1 to i32
    %c0_i32_0 = arith.constant 0 : i32
    %2 = arith.cmpi ne, %1, %c0_i32_0 : i32
    scf.if %2 {
      %cst_19 = arith.constant 0.000000e+00 : f32
      %32 = vector.broadcast %cst_19 : f32 to vector<16x32xf32>
      %c0_20 = arith.constant 0 : index
      %c0_21 = arith.constant 0 : index
      %33 = vector.load %arg10[%c0_20, %c0_21] : memref<16x32xf32, #tpu.memory_space<vmem>>, vector<16x32xf32>
      tpu.vector_store %arg10[%c0_20, %c0_21], %32 {strides = array<i32>} : memref<16x32xf32, #tpu.memory_space<vmem>>, vector<16x32xf32>,
    } else {
    }
    %c0 = arith.constant 0 : index
    %c0_1 = arith.constant 0 : index
    %3 = vector.load %arg2[%c0, %c0_1] : memref<16x32xf32, #tpu.memory_space<vmem>>, vector<16x32xf32>
    %4 = arith.truncf %3 : vector<16x32xf32> to vector<16x32xbf16>
    %c0_2 = arith.constant 0 : index
    %c0_3 = arith.constant 0 : index
    %5 = vector.load %arg3[%c0_2, %c0_3] : memref<32x64xbf16, #tpu.memory_space<vmem>>, vector<32x64xbf16>
    %cst = arith.constant dense<0.000000e+00> : vector<16x64xf32>
    %6 = tpu.matmul %4, %5, %cst {dimension_numbers = #tpu.dot_dimension_numbers<[1], [0], [0], [1], [0, 0, 1, 1], [], []>} : vector<16x32xbf16>, vector<32x64xbf16>, vector<16x64xf32> -> vector<16x64xf32>
    %c0_4 = arith.constant 0 : index
    %c0_5 = arith.constant 0 : index
    %7 = vector.load %arg4[%c0_4, %c0_5] : memref<1x64xf32, #tpu.memory_space<vmem>>, vector<1x64xf32>
    %8 = vector.broadcast %7 : vector<1x64xf32> to vector<16x64xf32>
    %9 = arith.addf %6, %8 : vector<16x64xf32>
    %cst_6 = arith.constant 5.000000e-01 : f32
    %10 = vector.broadcast %cst_6 : f32 to vector<16x64xf32>
    %11 = arith.mulf %10, %9 : vector<16x64xf32>
    %cst_7 = arith.constant 4.471500e-02 : f32
    %12 = vector.broadcast %cst_7 : f32 to vector<16x64xf32>
    %13 = arith.mulf %12, %9 : vector<16x64xf32>
    %14 = arith.mulf %13, %9 : vector<16x64xf32>
    %15 = arith.mulf %14, %9 : vector<16x64xf32>
    %16 = arith.addf %9, %15 : vector<16x64xf32>
    %cst_8 = arith.constant 0.797884583 : f32
    %17 = vector.broadcast %cst_8 : f32 to vector<16x64xf32>
    %18 = arith.mulf %17, %16 : vector<16x64xf32>
    %19 = math.tanh %18 : vector<16x64xf32>
    %cst_9 = arith.constant 1.000000e+00 : f32
    %20 = vector.broadcast %cst_9 : f32 to vector<16x64xf32>
    %21 = arith.addf %20, %19 : vector<16x64xf32>
    %22 = arith.mulf %11, %21 : vector<16x64xf32>
    %c0_10 = arith.constant 0 : index
    %c0_11 = arith.constant 0 : index
    %23 = vector.load %arg10[%c0_10, %c0_11] : memref<16x32xf32, #tpu.memory_space<vmem>>, vector<16x32xf32>
    %24 = arith.truncf %22 : vector<16x64xf32> to vector<16x64xbf16>
    %c0_12 = arith.constant 0 : index
    %c0_13 = arith.constant 0 : index
    %25 = vector.load %arg5[%c0_12, %c0_13] : memref<64x32xbf16, #tpu.memory_space<vmem>>, vector<64x32xbf16>
    %cst_14 = arith.constant dense<0.000000e+00> : vector<16x32xf32>
    %26 = tpu.matmul %24, %25, %cst_14 {dimension_numbers = #tpu.dot_dimension_numbers<[1], [0], [0], [1], [0, 0, 1, 1], [], []>} : vector<16x64xbf16>, vector<64x32xbf16>, vector<16x32xf32> -> vector<16x32xf32>
    %27 = arith.addf %23, %26 : vector<16x32xf32>
    %c0_15 = arith.constant 0 : index
    %c0_16 = arith.constant 0 : index
    %28 = vector.load %arg10[%c0_15, %c0_16] : memref<16x32xf32, #tpu.memory_space<vmem>>, vector<16x32xf32>
    tpu.vector_store %arg10[%c0_15, %c0_16], %27 {strides = array<i32>} : memref<16x32xf32, #tpu.memory_space<vmem>>, vector<16x32xf32>,
    %c0_i32_17 = arith.constant 0 : i32
    %29 = arith.cmpi eq, %arg1, %c0_i32_17 : i32
    %30 = arith.extui %29 : i1 to i32
    %c0_i32_18 = arith.constant 0 : i32
    %31 = arith.cmpi ne, %30, %c0_i32_18 : i32
    scf.if %31 {
      %c0_19 = arith.constant 0 : index
      %c0_20 = arith.constant 0 : index
      %32 = vector.load %arg10[%c0_19, %c0_20] : memref<16x32xf32, #tpu.memory_space<vmem>>, vector<16x32xf32>
      %c0_21 = arith.constant 0 : index
      %c0_22 = arith.constant 0 : index
      %33 = vector.load %arg6[%c0_21, %c0_22] : memref<1x32xf32, #tpu.memory_space<vmem>>, vector<1x32xf32>
      %34 = vector.broadcast %33 : vector<1x32xf32> to vector<16x32xf32>
      %35 = arith.addf %32, %34 : vector<16x32xf32>
      %c0_23 = arith.constant 0 : index
      %c0_24 = arith.constant 0 : index
      %36 = vector.load %arg2[%c0_23, %c0_24] : memref<16x32xf32, #tpu.memory_space<vmem>>, vector<16x32xf32>
      %37 = arith.addf %35, %36 : vector<16x32xf32>
      %c0_25 = arith.constant 0 : index
      %c0_26 = arith.constant 0 : index
      %38 = vector.load %arg7[%c0_25, %c0_26] : memref<1x32xf32, #tpu.memory_space<vmem>>, vector<1x32xf32>
      %c0_27 = arith.constant 0 : index
      %c0_28 = arith.constant 0 : index
      %39 = vector.load %arg8[%c0_27, %c0_28] : memref<1x32xf32, #tpu.memory_space<vmem>>, vector<1x32xf32>
      %cst_29 = arith.constant dense<0.000000e+00> : vector<16xf32>
      %40 = vector.multi_reduction <add>, %37, %cst_29 [1] : vector<16x32xf32> to vector<16xf32>
      %41 = vector.shape_cast %40 : vector<16xf32> to vector<16x1xf32>
      %cst_30 = arith.constant 3.200000e+01 : f32
      %42 = vector.broadcast %cst_30 : f32 to vector<16x1xf32>
      %43 = arith.divf %41, %42 : vector<16x1xf32>
      %44 = vector.broadcast %43 : vector<16x1xf32> to vector<16x32xf32>
      %45 = arith.subf %37, %44 : vector<16x32xf32>
      %46 = arith.mulf %45, %45 : vector<16x32xf32>
      %cst_31 = arith.constant dense<0.000000e+00> : vector<16xf32>
      %47 = vector.multi_reduction <add>, %46, %cst_31 [1] : vector<16x32xf32> to vector<16xf32>
      %48 = vector.shape_cast %47 : vector<16xf32> to vector<16x1xf32>
      %cst_32 = arith.constant 3.200000e+01 : f32
      %49 = vector.broadcast %cst_32 : f32 to vector<16x1xf32>
      %50 = arith.divf %48, %49 : vector<16x1xf32>
      %51 = vector.broadcast %43 : vector<16x1xf32> to vector<16x32xf32>
      %52 = arith.subf %37, %51 : vector<16x32xf32>
      %cst_33 = arith.constant 9.99999996E-13 : f32
      %53 = vector.broadcast %cst_33 : f32 to vector<16x1xf32>
      %54 = arith.addf %50, %53 : vector<16x1xf32>
      %55 = math.rsqrt %54 : vector<16x1xf32>
      %56 = vector.broadcast %55 : vector<16x1xf32> to vector<16x32xf32>
      %57 = arith.mulf %52, %56 : vector<16x32xf32>
      %58 = vector.broadcast %38 : vector<1x32xf32> to vector<16x32xf32>
      %59 = arith.mulf %57, %58 : vector<16x32xf32>
      %60 = vector.broadcast %39 : vector<1x32xf32> to vector<16x32xf32>
      %61 = arith.addf %59, %60 : vector<16x32xf32>
      %c0_34 = arith.constant 0 : index
      %c0_35 = arith.constant 0 : index
      %62 = vector.load %arg9[%c0_34, %c0_35] : memref<16x32xf32, #tpu.memory_space<vmem>>, vector<16x32xf32>
      tpu.vector_store %arg9[%c0_34, %c0_35], %61 {strides = array<i32>} : memref<16x32xf32, #tpu.memory_space<vmem>>, vector<16x32xf32>,
    } else {
    }
    return
  }
  func.func @transform_0(%arg0: i32, %arg1: i32) -> (i32, i32) {
    %c0_i32 = arith.constant 0 : i32
    %c0_i32_0 = arith.constant 0 : i32
    return %arg0, %c0_i32 : i32, i32
  }
  func.func @transform_1(%arg0: i32, %arg1: i32) -> (i32, i32) {
    %c0_i32 = arith.constant 0 : i32
    %c0_i32_0 = arith.constant 0 : i32
    return %c0_i32, %arg1 : i32, i32
  }
  func.func @transform_2(%arg0: i32, %arg1: i32) -> (i32, i32) {
    %c0_i32 = arith.constant 0 : i32
    %c0_i32_0 = arith.constant 0 : i32
    return %c0_i32, %arg1 : i32, i32
  }
  func.func @transform_3(%arg0: i32, %arg1: i32) -> (i32, i32) {
    %c0_i32 = arith.constant 0 : i32
    %c0_i32_0 = arith.constant 0 : i32
    return %arg1, %c0_i32 : i32, i32
  }
  func.func @transform_4(%arg0: i32, %arg1: i32) -> (i32, i32) {
    %c0_i32 = arith.constant 0 : i32
    %c0_i32_0 = arith.constant 0 : i32
    %c0_i32_1 = arith.constant 0 : i32
    return %c0_i32, %c0_i32_0 : i32, i32
  }
  func.func @transform_5(%arg0: i32, %arg1: i32) -> (i32, i32) {
    %c0_i32 = arith.constant 0 : i32
    %c0_i32_0 = arith.constant 0 : i32
    %c0_i32_1 = arith.constant 0 : i32
    return %c0_i32, %c0_i32_0 : i32, i32
  }
  func.func @transform_6(%arg0: i32, %arg1: i32) -> (i32, i32) {
    %c0_i32 = arith.constant 0 : i32
    %c0_i32_0 = arith.constant 0 : i32
    %c0_i32_1 = arith.constant 0 : i32
    return %c0_i32, %c0_i32_0 : i32, i32
  }
  func.func @transform_7(%arg0: i32, %arg1: i32) -> (i32, i32) {
    %c0_i32 = arith.constant 0 : i32
    %c0_i32_0 = arith.constant 0 : i32
    return %arg0, %c0_i32 : i32, i32
  }
}

module attributes {stable_mosaic.version = 11 : i64} {
  func.func @_ffn_kernel(%arg0: i32, %arg1: i32, %arg2: memref<16x32xf32, #tpu.memory_space<vmem>>, %arg3: memref<32x64xbf16, #tpu.memory_space<vmem>>, %arg4: memref<1x64xf32, #tpu.memory_space<vmem>>, %arg5: memref<64x32xbf16, #tpu.memory_space<vmem>>, %arg6: memref<1x32xf32, #tpu.memory_space<vmem>>, %arg7: memref<1x32xf32, #tpu.memory_space<vmem>>, %arg8: memref<1x32xf32, #tpu.memory_space<vmem>>, %arg9: memref<16x32xf32, #tpu.memory_space<vmem>>, %arg10: memref<16x32xf32, #tpu.memory_space<vmem>>) attributes {dimension_semantics = [#tpu.dimension_semantics<parallel>, #tpu.dimension_semantics<arbitrary>], iteration_bounds = array<i64: 1, 1>, scalar_prefetch = 0 : i64, scratch_operands = 1 : i64, tpu.core_type = #tpu.core_type<tc>, window_params = [{transform_indices = @transform_0, window_bounds = array<i64: 16, 32>}, {transform_indices = @transform_1, window_bounds = array<i64: 32, 64>}, {transform_indices = @transform_2, window_bounds = array<i64: 1, 64>}, {transform_indices = @transform_3, window_bounds = array<i64: 64, 32>}, {pipeline_mode = #tpu.pipeline_mode<synchronous>, transform_indices = @transform_4, window_bounds = array<i64: 1, 32>}, {pipeline_mode = #tpu.pipeline_mode<synchronous>, transform_indices = @transform_5, window_bounds = array<i64: 1, 32>}, {pipeline_mode = #tpu.pipeline_mode<synchronous>, transform_indices = @transform_6, window_bounds = array<i64: 1, 32>}, {transform_indices = @transform_7, window_bounds = array<i64: 16, 32>}]} {
    %c0_i32 = arith.constant 0 : i32
    %0 = arith.cmpi eq, %arg1, %c0_i32 : i32
    %1 = arith.extui %0 : i1 to i32
    %c0_i32_0 = arith.constant 0 : i32
    %2 = arith.cmpi ne, %1, %c0_i32_0 : i32
    scf.if %2 {
      %cst_19 = arith.constant 0.000000e+00 : f32
      %32 = vector.broadcast %cst_19 : f32 to vector<16x32xf32>
      %c0_20 = arith.constant 0 : index
      %c0_21 = arith.constant 0 : index
      %33 = vector.load %arg10[%c0_20, %c0_21] : memref<16x32xf32, #tpu.memory_space<vmem>>, vector<16x32xf32>
      tpu.vector_store %arg10[%c0_20, %c0_21], %32 {strides = array<i32>} : memref<16x32xf32, #tpu.memory_space<vmem>>, vector<16x32xf32>,
    } else {
    }
    %c0 = arith.constant 0 : index
    %c0_1 = arith.constant 0 : index
    %3 = vector.load %arg2[%c0, %c0_1] : memref<16x32xf32, #tpu.memory_space<vmem>>, vector<16x32xf32>
    %4 = arith.truncf %3 : vector<16x32xf32> to vector<16x32xbf16>
    %c0_2 = arith.constant 0 : index
    %c0_3 = arith.constant 0 : index
    %5 = vector.load %arg3[%c0_2, %c0_3] : memref<32x64xbf16, #tpu.memory_space<vmem>>, vector<32x64xbf16>
    %cst = arith.constant dense<0.000000e+00> : vector<16x64xf32>
    %6 = tpu.matmul %4, %5, %cst {dimension_numbers = #tpu.dot_dimension_numbers<[1], [0], [0], [1], [0, 0, 1, 1], [], []>} : vector<16x32xbf16>, vector<32x64xbf16>, vector<16x64xf32> -> vector<16x64xf32>
    %c0_4 = arith.constant 0 : index
    %c0_5 = arith.constant 0 : index
    %7 = vector.load %arg4[%c0_4, %c0_5] : memref<1x64xf32, #tpu.memory_space<vmem>>, vector<1x64xf32>
    %8 = vector.broadcast %7 : vector<1x64xf32> to vector<16x64xf32>
    %9 = arith.addf %6, %8 : vector<16x64xf32>
    %cst_6 = arith.constant 5.000000e-01 : f32
    %10 = vector.broadcast %cst_6 : f32 to vector<16x64xf32>
    %11 = arith.mulf %10, %9 : vector<16x64xf32>
    %cst_7 = arith.constant 4.471500e-02 : f32
    %12 = vector.broadcast %cst_7 : f32 to vector<16x64xf32>
    %13 = arith.mulf %12, %9 : vector<16x64xf32>
    %14 = arith.mulf %13, %9 : vector<16x64xf32>
    %15 = arith.mulf %14, %9 : vector<16x64xf32>
    %16 = arith.addf %9, %15 : vector<16x64xf32>
    %cst_8 = arith.constant 0.797884583 : f32
    %17 = vector.broadcast %cst_8 : f32 to vector<16x64xf32>
    %18 = arith.mulf %17, %16 : vector<16x64xf32>
    %19 = math.tanh %18 : vector<16x64xf32>
    %cst_9 = arith.constant 1.000000e+00 : f32
    %20 = vector.broadcast %cst_9 : f32 to vector<16x64xf32>
    %21 = arith.addf %20, %19 : vector<16x64xf32>
    %22 = arith.mulf %11, %21 : vector<16x64xf32>
    %c0_10 = arith.constant 0 : index
    %c0_11 = arith.constant 0 : index
    %23 = vector.load %arg10[%c0_10, %c0_11] : memref<16x32xf32, #tpu.memory_space<vmem>>, vector<16x32xf32>
    %24 = arith.truncf %22 : vector<16x64xf32> to vector<16x64xbf16>
    %c0_12 = arith.constant 0 : index
    %c0_13 = arith.constant 0 : index
    %25 = vector.load %arg5[%c0_12, %c0_13] : memref<64x32xbf16, #tpu.memory_space<vmem>>, vector<64x32xbf16>
    %cst_14 = arith.constant dense<0.000000e+00> : vector<16x32xf32>
    %26 = tpu.matmul %24, %25, %cst_14 {dimension_numbers = #tpu.dot_dimension_numbers<[1], [0], [0], [1], [0, 0, 1, 1], [], []>} : vector<16x64xbf16>, vector<64x32xbf16>, vector<16x32xf32> -> vector<16x32xf32>
    %27 = arith.addf %23, %26 : vector<16x32xf32>
    %c0_15 = arith.constant 0 : index
    %c0_16 = arith.constant 0 : index
    %28 = vector.load %arg10[%c0_15, %c0_16] : memref<16x32xf32, #tpu.memory_space<vmem>>, vector<16x32xf32>
    tpu.vector_store %arg10[%c0_15, %c0_16], %27 {strides = array<i32>} : memref<16x32xf32, #tpu.memory_space<vmem>>, vector<16x32xf32>,
    %c0_i32_17 = arith.constant 0 : i32
    %29 = arith.cmpi eq, %arg1, %c0_i32_17 : i32
    %30 = arith.extui %29 : i1 to i32
    %c0_i32_18 = arith.constant 0 : i32
    %31 = arith.cmpi ne, %30, %c0_i32_18 : i32
    scf.if %31 {
      %c0_19 = arith.constant 0 : index
      %c0_20 = arith.constant 0 : index
      %32 = vector.load %arg10[%c0_19, %c0_20] : memref<16x32xf32, #tpu.memory_space<vmem>>, vector<16x32xf32>
      %c0_21 = arith.constant 0 : index
      %c0_22 = arith.constant 0 : index
      %33 = vector.load %arg6[%c0_21, %c0_22] : memref<1x32xf32, #tpu.memory_space<vmem>>, vector<1x32xf32>
      %34 = vector.broadcast %33 : vector<1x32xf32> to vector<16x32xf32>
      %35 = arith.addf %32, %34 : vector<16x32xf32>
      %c0_23 = arith.constant 0 : index
      %c0_24 = arith.constant 0 : index
      %36 = vector.load %arg2[%c0_23, %c0_24] : memref<16x32xf32, #tpu.memory_space<vmem>>, vector<16x32xf32>
      %37 = arith.addf %35, %36 : vector<16x32xf32>
      %c0_25 = arith.constant 0 : index
      %c0_26 = arith.constant 0 : index
      %38 = vector.load %arg7[%c0_25, %c0_26] : memref<1x32xf32, #tpu.memory_space<vmem>>, vector<1x32xf32>
      %c0_27 = arith.constant 0 : index
      %c0_28 = arith.constant 0 : index
      %39 = vector.load %arg8[%c0_27, %c0_28] : memref<1x32xf32, #tpu.memory_space<vmem>>, vector<1x32xf32>
      %cst_29 = arith.constant dense<0.000000e+00> : vector<16xf32>
      %40 = vector.multi_reduction <add>, %37, %cst_29 [1] : vector<16x32xf32> to vector<16xf32>
      %41 = vector.shape_cast %40 : vector<16xf32> to vector<16x1xf32>
      %cst_30 = arith.constant 3.200000e+01 : f32
      %42 = vector.broadcast %cst_30 : f32 to vector<16x1xf32>
      %43 = arith.divf %41, %42 : vector<16x1xf32>
      %44 = vector.broadcast %43 : vector<16x1xf32> to vector<16x32xf32>
      %45 = arith.subf %37, %44 : vector<16x32xf32>
      %46 = arith.mulf %45, %45 : vector<16x32xf32>
      %cst_31 = arith.constant dense<0.000000e+00> : vector<16xf32>
      %47 = vector.multi_reduction <add>, %46, %cst_31 [1] : vector<16x32xf32> to vector<16xf32>
      %48 = vector.shape_cast %47 : vector<16xf32> to vector<16x1xf32>
      %cst_32 = arith.constant 3.200000e+01 : f32
      %49 = vector.broadcast %cst_32 : f32 to vector<16x1xf32>
      %50 = arith.divf %48, %49 : vector<16x1xf32>
      %51 = vector.broadcast %43 : vector<16x1xf32> to vector<16x32xf32>
      %52 = arith.subf %37, %51 : vector<16x32xf32>
      %cst_33 = arith.constant 9.99999996E-13 : f32
      %53 = vector.broadcast %cst_33 : f32 to vector<16x1xf32>
      %54 = arith.addf %50, %53 : vector<16x1xf32>
      %55 = math.rsqrt %54 : vector<16x1xf32>
      %56 = vector.broadcast %55 : vector<16x1xf32> to vector<16x32xf32>
      %57 = arith.mulf %52, %56 : vector<16x32xf32>
      %58 = vector.broadcast %38 : vector<1x32xf32> to vector<16x32xf32>
      %59 = arith.mulf %57, %58 : vector<16x32xf32>
      %60 = vector.broadcast %39 : vector<1x32xf32> to vector<16x32xf32>
      %61 = arith.addf %59, %60 : vector<16x32xf32>
      %c0_34 = arith.constant 0 : index
      %c0_35 = arith.constant 0 : index
      %62 = vector.load %arg9[%c0_34, %c0_35] : memref<16x32xf32, #tpu.memory_space<vmem>>, vector<16x32xf32>
      tpu.vector_store %arg9[%c0_34, %c0_35], %61 {strides = array<i32>} : memref<16x32xf32, #tpu.memory_space<vmem>>, vector<16x32xf32>,
    } else {
    }
    return
  }
  func.func @transform_0(%arg0: i32, %arg1: i32) -> (i32, i32) {
    %c0_i32 = arith.constant 0 : i32
    %c0_i32_0 = arith.constant 0 : i32
    return %arg0, %c0_i32 : i32, i32
  }
  func.func @transform_1(%arg0: i32, %arg1: i32) -> (i32, i32) {
    %c0_i32 = arith.constant 0 : i32
    %c0_i32_0 = arith.constant 0 : i32
    return %c0_i32, %arg1 : i32, i32
  }
  func.func @transform_2(%arg0: i32, %arg1: i32) -> (i32, i32) {
    %c0_i32 = arith.constant 0 : i32
    %c0_i32_0 = arith.constant 0 : i32
    return %c0_i32, %arg1 : i32, i32
  }
  func.func @transform_3(%arg0: i32, %arg1: i32) -> (i32, i32) {
    %c0_i32 = arith.constant 0 : i32
    %c0_i32_0 = arith.constant 0 : i32
    return %arg1, %c0_i32 : i32, i32
  }
  func.func @transform_4(%arg0: i32, %arg1: i32) -> (i32, i32) {
    %c0_i32 = arith.constant 0 : i32
    %c0_i32_0 = arith.constant 0 : i32
    %c0_i32_1 = arith.constant 0 : i32
    return %c0_i32, %c0_i32_0 : i32, i32
  }
  func.func @transform_5(%arg0: i32, %arg1: i32) -> (i32, i32) {
    %c0_i32 = arith.constant 0 : i32
    %c0_i32_0 = arith.constant 0 : i32
    %c0_i32_1 = arith.constant 0 : i32
    return %c0_i32, %c0_i32_0 : i32, i32
  }
  func.func @transform_6(%arg0: i32, %arg1: i32) -> (i32, i32) {
    %c0_i32 = arith.constant 0 : i32
    %c0_i32_0 = arith.constant 0 : i32
    %c0_i32_1 = arith.constant 0 : i32
    return %c0_i32, %c0_i32_0 : i32, i32
  }
  func.func @transform_7(%arg0: i32, %arg1: i32) -> (i32, i32) {
    %c0_i32 = arith.constant 0 : i32
    %c0_i32_0 = arith.constant 0 : i32
    return %arg0, %c0_i32 : i32, i32
  }
}

module attributes {stable_mosaic.version = 11 : i64} {
  func.func @_attn_block_kernel(%arg0: i32, %arg1: i32, %arg2: memref<1x8x32xf32, #tpu.memory_space<vmem>>, %arg3: memref<1x1x8xf32, #tpu.memory_space<vmem>>, %arg4: memref<1x32x8xbf16, #tpu.memory_space<vmem>>, %arg5: memref<1x1x8xf32, #tpu.memory_space<vmem>>, %arg6: memref<1x32x8xbf16, #tpu.memory_space<vmem>>, %arg7: memref<1x1x8xf32, #tpu.memory_space<vmem>>, %arg8: memref<1x32x8xbf16, #tpu.memory_space<vmem>>, %arg9: memref<1x1x8xf32, #tpu.memory_space<vmem>>, %arg10: memref<1x8x32xbf16, #tpu.memory_space<vmem>>, %arg11: memref<1x32xf32, #tpu.memory_space<vmem>>, %arg12: memref<1x32xf32, #tpu.memory_space<vmem>>, %arg13: memref<1x32xf32, #tpu.memory_space<vmem>>, %arg14: memref<1x8x32xf32, #tpu.memory_space<vmem>>, %arg15: memref<8x32xf32, #tpu.memory_space<vmem>>) attributes {dimension_semantics = [#tpu.dimension_semantics<parallel>, #tpu.dimension_semantics<arbitrary>], iteration_bounds = array<i64: 2, 4>, scalar_prefetch = 0 : i64, scratch_operands = 1 : i64, tpu.core_type = #tpu.core_type<tc>, window_params = [{transform_indices = @transform_0, window_bounds = array<i64: 1, 8, 32>}, {transform_indices = @transform_1, window_bounds = array<i64: 1, 1, 8>}, {transform_indices = @transform_2, window_bounds = array<i64: 1, 32, 8>}, {transform_indices = @transform_3, window_bounds = array<i64: 1, 1, 8>}, {transform_indices = @transform_4, window_bounds = array<i64: 1, 32, 8>}, {transform_indices = @transform_5, window_bounds = array<i64: 1, 1, 8>}, {transform_indices = @transform_6, window_bounds = array<i64: 1, 32, 8>}, {transform_indices = @transform_7, window_bounds = array<i64: 1, 1, 8>}, {transform_indices = @transform_8, window_bounds = array<i64: 1, 8, 32>}, {pipeline_mode = #tpu.pipeline_mode<synchronous>, transform_indices = @transform_9, window_bounds = array<i64: 1, 32>}, {pipeline_mode = #tpu.pipeline_mode<synchronous>, transform_indices = @transform_10, window_bounds = array<i64: 1, 32>}, {pipeline_mode = #tpu.pipeline_mode<synchronous>, transform_indices = @transform_11, window_bounds = array<i64: 1, 32>}, {transform_indices = @transform_12, window_bounds = array<i64: 1, 8, 32>}]} {
    %c0_i32 = arith.constant 0 : i32
    %0 = arith.cmpi eq, %arg1, %c0_i32 : i32
    %1 = arith.extui %0 : i1 to i32
    %c0_i32_0 = arith.constant 0 : i32
    %2 = arith.cmpi ne, %1, %c0_i32_0 : i32
    scf.if %2 {
      %cst_40 = arith.constant 0.000000e+00 : f32
      %59 = vector.broadcast %cst_40 : f32 to vector<8x32xf32>
      %c0_41 = arith.constant 0 : index
      %c0_42 = arith.constant 0 : index
      %60 = vector.load %arg15[%c0_41, %c0_42] : memref<8x32xf32, #tpu.memory_space<vmem>>, vector<8x32xf32>
      tpu.vector_store %arg15[%c0_41, %c0_42], %59 {strides = array<i32>} : memref<8x32xf32, #tpu.memory_space<vmem>>, vector<8x32xf32>,
    } else {
    }
    %c0 = arith.constant 0 : index
    %c0_1 = arith.constant 0 : index
    %c0_2 = arith.constant 0 : index
    %3 = vector.load %arg2[%c0, %c0_1, %c0_2] : memref<1x8x32xf32, #tpu.memory_space<vmem>>, vector<1x8x32xf32>
    %4 = vector.shape_cast %3 : vector<1x8x32xf32> to vector<8x32xf32>
    %5 = arith.truncf %4 : vector<8x32xf32> to vector<8x32xbf16>
    %c0_3 = arith.constant 0 : index
    %c0_4 = arith.constant 0 : index
    %c0_5 = arith.constant 0 : index
    %6 = vector.load %arg3[%c0_3, %c0_4, %c0_5] : memref<1x1x8xf32, #tpu.memory_space<vmem>>, vector<1x1x8xf32>
    %7 = vector.shape_cast %6 : vector<1x1x8xf32> to vector<1x8xf32>
    %c0_6 = arith.constant 0 : index
    %c0_7 = arith.constant 0 : index
    %c0_8 = arith.constant 0 : index
    %8 = vector.load %arg4[%c0_6, %c0_7, %c0_8] : memref<1x32x8xbf16, #tpu.memory_space<vmem>>, vector<1x32x8xbf16>
    %9 = vector.shape_cast %8 : vector<1x32x8xbf16> to vector<32x8xbf16>
    %cst = arith.constant dense<0.000000e+00> : vector<8x8xf32>
    %10 = tpu.matmul %5, %9, %cst {dimension_numbers = #tpu.dot_dimension_numbers<[1], [0], [0], [1], [0, 0, 1, 1], [], []>} : vector<8x32xbf16>, vector<32x8xbf16>, vector<8x8xf32> -> vector<8x8xf32>
    %c0_9 = arith.constant 0 : index
    %c0_10 = arith.constant 0 : index
    %c0_11 = arith.constant 0 : index
    %11 = vector.load %arg5[%c0_9, %c0_10, %c0_11] : memref<1x1x8xf32, #tpu.memory_space<vmem>>, vector<1x1x8xf32>
    %12 = vector.shape_cast %11 : vector<1x1x8xf32> to vector<1x8xf32>
    %13 = vector.broadcast %12 : vector<1x8xf32> to vector<8x8xf32>
    %14 = arith.addf %10, %13 : vector<8x8xf32>
    %c0_12 = arith.constant 0 : index
    %c0_13 = arith.constant 0 : index
    %c0_14 = arith.constant 0 : index
    %15 = vector.load %arg6[%c0_12, %c0_13, %c0_14] : memref<1x32x8xbf16, #tpu.memory_space<vmem>>, vector<1x32x8xbf16>
    %16 = vector.shape_cast %15 : vector<1x32x8xbf16> to vector<32x8xbf16>
    %cst_15 = arith.constant dense<0.000000e+00> : vector<8x8xf32>
    %17 = tpu.matmul %5, %16, %cst_15 {dimension_numbers = #tpu.dot_dimension_numbers<[1], [0], [0], [1], [0, 0, 1, 1], [], []>} : vector<8x32xbf16>, vector<32x8xbf16>, vector<8x8xf32> -> vector<8x8xf32>
    %c0_16 = arith.constant 0 : index
    %c0_17 = arith.constant 0 : index
    %c0_18 = arith.constant 0 : index
    %18 = vector.load %arg7[%c0_16, %c0_17, %c0_18] : memref<1x1x8xf32, #tpu.memory_space<vmem>>, vector<1x1x8xf32>
    %19 = vector.shape_cast %18 : vector<1x1x8xf32> to vector<1x8xf32>
    %20 = vector.broadcast %19 : vector<1x8xf32> to vector<8x8xf32>
    %21 = arith.addf %17, %20 : vector<8x8xf32>
    %c0_19 = arith.constant 0 : index
    %c0_20 = arith.constant 0 : index
    %c0_21 = arith.constant 0 : index
    %22 = vector.load %arg8[%c0_19, %c0_20, %c0_21] : memref<1x32x8xbf16, #tpu.memory_space<vmem>>, vector<1x32x8xbf16>
    %23 = vector.shape_cast %22 : vector<1x32x8xbf16> to vector<32x8xbf16>
    %cst_22 = arith.constant dense<0.000000e+00> : vector<8x8xf32>
    %24 = tpu.matmul %5, %23, %cst_22 {dimension_numbers = #tpu.dot_dimension_numbers<[1], [0], [0], [1], [0, 0, 1, 1], [], []>} : vector<8x32xbf16>, vector<32x8xbf16>, vector<8x8xf32> -> vector<8x8xf32>
    %c0_23 = arith.constant 0 : index
    %c0_24 = arith.constant 0 : index
    %c0_25 = arith.constant 0 : index
    %25 = vector.load %arg9[%c0_23, %c0_24, %c0_25] : memref<1x1x8xf32, #tpu.memory_space<vmem>>, vector<1x1x8xf32>
    %26 = vector.shape_cast %25 : vector<1x1x8xf32> to vector<1x8xf32>
    %27 = vector.broadcast %26 : vector<1x8xf32> to vector<8x8xf32>
    %28 = arith.addf %24, %27 : vector<8x8xf32>
    %29 = arith.truncf %14 : vector<8x8xf32> to vector<8x8xbf16>
    %30 = arith.truncf %21 : vector<8x8xf32> to vector<8x8xbf16>
    %cst_26 = arith.constant dense<0.000000e+00> : vector<8x8xf32>
    %31 = tpu.matmul %29, %30, %cst_26 {dimension_numbers = #tpu.dot_dimension_numbers<[1], [1], [0], [0], [0, 0, 1, 0], [], []>} : vector<8x8xbf16>, vector<8x8xbf16>, vector<8x8xf32> -> vector<8x8xf32>
    %cst_27 = arith.constant 0.353553385 : f32
    %32 = vector.broadcast %cst_27 : f32 to vector<8x8xf32>
    %33 = arith.mulf %31, %32 : vector<8x8xf32>
    %34 = vector.broadcast %7 : vector<1x8xf32> to vector<8x8xf32>
    %35 = arith.addf %33, %34 : vector<8x8xf32>
    %cst_28 = arith.constant dense<0xFF800000> : vector<8xf32>
    %36 = vector.multi_reduction <maximumf>, %35, %cst_28 [1] : vector<8x8xf32> to vector<8xf32>
    %37 = vector.shape_cast %36 : vector<8xf32> to vector<8x1xf32>
    %38 = vector.broadcast %37 : vector<8x1xf32> to vector<8x8xf32>
    %39 = arith.subf %35, %38 : vector<8x8xf32>
    %40 = math.exp %39 : vector<8x8xf32>
    %cst_29 = arith.constant dense<0.000000e+00> : vector<8xf32>
    %41 = vector.multi_reduction <add>, %40, %cst_29 [1] : vector<8x8xf32> to vector<8xf32>
    %42 = vector.shape_cast %41 : vector<8xf32> to vector<8x1xf32>
    %43 = tpu.reciprocal %42 {approx = true} : vector<8x1xf32> -> vector<8x1xf32>
    %44 = vector.broadcast %43 : vector<8x1xf32> to vector<8x8xf32>
    %45 = arith.mulf %40, %44 : vector<8x8xf32>
    %46 = arith.truncf %45 : vector<8x8xf32> to vector<8x8xbf16>
    %47 = arith.truncf %28 : vector<8x8xf32> to vector<8x8xbf16>
    %cst_30 = arith.constant dense<0.000000e+00> : vector<8x8xf32>
    %48 = tpu.matmul %46, %47, %cst_30 {dimension_numbers = #tpu.dot_dimension_numbers<[1], [0], [0], [1], [0, 0, 1, 1], [], []>} : vector<8x8xbf16>, vector<8x8xbf16>, vector<8x8xf32> -> vector<8x8xf32>
    %c0_31 = arith.constant 0 : index
    %c0_32 = arith.constant 0 : index
    %49 = vector.load %arg15[%c0_31, %c0_32] : memref<8x32xf32, #tpu.memory_space<vmem>>, vector<8x32xf32>
    %50 = arith.truncf %48 : vector<8x8xf32> to vector<8x8xbf16>
    %c0_33 = arith.constant 0 : index
    %c0_34 = arith.constant 0 : index
    %c0_35 = arith.constant 0 : index
    %51 = vector.load %arg10[%c0_33, %c0_34, %c0_35] : memref<1x8x32xbf16, #tpu.memory_space<vmem>>, vector<1x8x32xbf16>
    %52 = vector.shape_cast %51 : vector<1x8x32xbf16> to vector<8x32xbf16>
    %cst_36 = arith.constant dense<0.000000e+00> : vector<8x32xf32>
    %53 = tpu.matmul %50, %52, %cst_36 {dimension_numbers = #tpu.dot_dimension_numbers<[1], [0], [0], [1], [0, 0, 1, 1], [], []>} : vector<8x8xbf16>, vector<8x32xbf16>, vector<8x32xf32> -> vector<8x32xf32>
    %54 = arith.addf %49, %53 : vector<8x32xf32>
    %c0_37 = arith.constant 0 : index
    %c0_38 = arith.constant 0 : index
    %55 = vector.load %arg15[%c0_37, %c0_38] : memref<8x32xf32, #tpu.memory_space<vmem>>, vector<8x32xf32>
    tpu.vector_store %arg15[%c0_37, %c0_38], %54 {strides = array<i32>} : memref<8x32xf32, #tpu.memory_space<vmem>>, vector<8x32xf32>,
    %c3_i32 = arith.constant 3 : i32
    %56 = arith.cmpi eq, %arg1, %c3_i32 : i32
    %57 = arith.extui %56 : i1 to i32
    %c0_i32_39 = arith.constant 0 : i32
    %58 = arith.cmpi ne, %57, %c0_i32_39 : i32
    scf.if %58 {
      %c0_40 = arith.constant 0 : index
      %c0_41 = arith.constant 0 : index
      %59 = vector.load %arg15[%c0_40, %c0_41] : memref<8x32xf32, #tpu.memory_space<vmem>>, vector<8x32xf32>
      %c0_42 = arith.constant 0 : index
      %c0_43 = arith.constant 0 : index
      %60 = vector.load %arg11[%c0_42, %c0_43] : memref<1x32xf32, #tpu.memory_space<vmem>>, vector<1x32xf32>
      %61 = vector.broadcast %60 : vector<1x32xf32> to vector<8x32xf32>
      %62 = arith.addf %59, %61 : vector<8x32xf32>
      %c0_44 = arith.constant 0 : index
      %c0_45 = arith.constant 0 : index
      %c0_46 = arith.constant 0 : index
      %63 = vector.load %arg2[%c0_44, %c0_45, %c0_46] : memref<1x8x32xf32, #tpu.memory_space<vmem>>, vector<1x8x32xf32>
      %64 = vector.shape_cast %63 : vector<1x8x32xf32> to vector<8x32xf32>
      %65 = arith.addf %62, %64 : vector<8x32xf32>
      %c0_47 = arith.constant 0 : index
      %c0_48 = arith.constant 0 : index
      %66 = vector.load %arg12[%c0_47, %c0_48] : memref<1x32xf32, #tpu.memory_space<vmem>>, vector<1x32xf32>
      %c0_49 = arith.constant 0 : index
      %c0_50 = arith.constant 0 : index
      %67 = vector.load %arg13[%c0_49, %c0_50] : memref<1x32xf32, #tpu.memory_space<vmem>>, vector<1x32xf32>
      %cst_51 = arith.constant dense<0.000000e+00> : vector<8xf32>
      %68 = vector.multi_reduction <add>, %65, %cst_51 [1] : vector<8x32xf32> to vector<8xf32>
      %69 = vector.shape_cast %68 : vector<8xf32> to vector<8x1xf32>
      %cst_52 = arith.constant 3.200000e+01 : f32
      %70 = vector.broadcast %cst_52 : f32 to vector<8x1xf32>
      %71 = arith.divf %69, %70 : vector<8x1xf32>
      %72 = vector.broadcast %71 : vector<8x1xf32> to vector<8x32xf32>
      %73 = arith.subf %65, %72 : vector<8x32xf32>
      %74 = arith.mulf %73, %73 : vector<8x32xf32>
      %cst_53 = arith.constant dense<0.000000e+00> : vector<8xf32>
      %75 = vector.multi_reduction <add>, %74, %cst_53 [1] : vector<8x32xf32> to vector<8xf32>
      %76 = vector.shape_cast %75 : vector<8xf32> to vector<8x1xf32>
      %cst_54 = arith.constant 3.200000e+01 : f32
      %77 = vector.broadcast %cst_54 : f32 to vector<8x1xf32>
      %78 = arith.divf %76, %77 : vector<8x1xf32>
      %79 = vector.broadcast %71 : vector<8x1xf32> to vector<8x32xf32>
      %80 = arith.subf %65, %79 : vector<8x32xf32>
      %cst_55 = arith.constant 9.99999996E-13 : f32
      %81 = vector.broadcast %cst_55 : f32 to vector<8x1xf32>
      %82 = arith.addf %78, %81 : vector<8x1xf32>
      %83 = math.rsqrt %82 : vector<8x1xf32>
      %84 = vector.broadcast %83 : vector<8x1xf32> to vector<8x32xf32>
      %85 = arith.mulf %80, %84 : vector<8x32xf32>
      %86 = vector.broadcast %66 : vector<1x32xf32> to vector<8x32xf32>
      %87 = arith.mulf %85, %86 : vector<8x32xf32>
      %88 = vector.broadcast %67 : vector<1x32xf32> to vector<8x32xf32>
      %89 = arith.addf %87, %88 : vector<8x32xf32>
      %c0_56 = arith.constant 0 : index
      %c0_57 = arith.constant 0 : index
      %c0_58 = arith.constant 0 : index
      %90 = vector.load %arg14[%c0_56, %c0_57, %c0_58] : memref<1x8x32xf32, #tpu.memory_space<vmem>>, vector<1x8x32xf32>
      %91 = vector.shape_cast %90 : vector<1x8x32xf32> to vector<8x32xf32>
      %92 = vector.shape_cast %89 : vector<8x32xf32> to vector<1x8x32xf32>
      tpu.vector_store %arg14[%c0_56, %c0_57, %c0_58], %92 {strides = array<i32>} : memref<1x8x32xf32, #tpu.memory_space<vmem>>, vector<1x8x32xf32>,
    } else {
    }
    return
  }
  func.func @transform_0(%arg0: i32, %arg1: i32) -> (i32, i32, i32) {
    %c0_i32 = arith.constant 0 : i32
    %c0_i32_0 = arith.constant 0 : i32
    %c0_i32_1 = arith.constant 0 : i32
    return %arg0, %c0_i32, %c0_i32_0 : i32, i32, i32
  }
  func.func @transform_1(%arg0: i32, %arg1: i32) -> (i32, i32, i32) {
    %c0_i32 = arith.constant 0 : i32
    %c0_i32_0 = arith.constant 0 : i32
    %c0_i32_1 = arith.constant 0 : i32
    return %arg0, %c0_i32, %c0_i32_0 : i32, i32, i32
  }
  func.func @transform_2(%arg0: i32, %arg1: i32) -> (i32, i32, i32) {
    %c0_i32 = arith.constant 0 : i32
    %c0_i32_0 = arith.constant 0 : i32
    %c0_i32_1 = arith.constant 0 : i32
    return %arg1, %c0_i32, %c0_i32_0 : i32, i32, i32
  }
  func.func @transform_3(%arg0: i32, %arg1: i32) -> (i32, i32, i32) {
    %c0_i32 = arith.constant 0 : i32
    %c0_i32_0 = arith.constant 0 : i32
    %c0_i32_1 = arith.constant 0 : i32
    return %arg1, %c0_i32, %c0_i32_0 : i32, i32, i32
  }
  func.func @transform_4(%arg0: i32, %arg1: i32) -> (i32, i32, i32) {
    %c0_i32 = arith.constant 0 : i32
    %c0_i32_0 = arith.constant 0 : i32
    %c0_i32_1 = arith.constant 0 : i32
    return %arg1, %c0_i32, %c0_i32_0 : i32, i32, i32
  }
  func.func @transform_5(%arg0: i32, %arg1: i32) -> (i32, i32, i32) {
    %c0_i32 = arith.constant 0 : i32
    %c0_i32_0 = arith.constant 0 : i32
    %c0_i32_1 = arith.constant 0 : i32
    return %arg1, %c0_i32, %c0_i32_0 : i32, i32, i32
  }
  func.func @transform_6(%arg0: i32, %arg1: i32) -> (i32, i32, i32) {
    %c0_i32 = arith.constant 0 : i32
    %c0_i32_0 = arith.constant 0 : i32
    %c0_i32_1 = arith.constant 0 : i32
    return %arg1, %c0_i32, %c0_i32_0 : i32, i32, i32
  }
  func.func @transform_7(%arg0: i32, %arg1: i32) -> (i32, i32, i32) {
    %c0_i32 = arith.constant 0 : i32
    %c0_i32_0 = arith.constant 0 : i32
    %c0_i32_1 = arith.constant 0 : i32
    return %arg1, %c0_i32, %c0_i32_0 : i32, i32, i32
  }
  func.func @transform_8(%arg0: i32, %arg1: i32) -> (i32, i32, i32) {
    %c0_i32 = arith.constant 0 : i32
    %c0_i32_0 = arith.constant 0 : i32
    %c0_i32_1 = arith.constant 0 : i32
    return %arg1, %c0_i32, %c0_i32_0 : i32, i32, i32
  }
  func.func @transform_9(%arg0: i32, %arg1: i32) -> (i32, i32) {
    %c0_i32 = arith.constant 0 : i32
    %c0_i32_0 = arith.constant 0 : i32
    %c0_i32_1 = arith.constant 0 : i32
    return %c0_i32, %c0_i32_0 : i32, i32
  }
  func.func @transform_10(%arg0: i32, %arg1: i32) -> (i32, i32) {
    %c0_i32 = arith.constant 0 : i32
    %c0_i32_0 = arith.constant 0 : i32
    %c0_i32_1 = arith.constant 0 : i32
    return %c0_i32, %c0_i32_0 : i32, i32
  }
  func.func @transform_11(%arg0: i32, %arg1: i32) -> (i32, i32) {
    %c0_i32 = arith.constant 0 : i32
    %c0_i32_0 = arith.constant 0 : i32
    %c0_i32_1 = arith.constant 0 : i32
    return %c0_i32, %c0_i32_0 : i32, i32
  }
  func.func @transform_12(%arg0: i32, %arg1: i32) -> (i32, i32, i32) {
    %c0_i32 = arith.constant 0 : i32
    %c0_i32_0 = arith.constant 0 : i32
    %c0_i32_1 = arith.constant 0 : i32
    return %arg0, %c0_i32, %c0_i32_0 : i32, i32, i32
  }
}

</mosaic_0001>

<llo_original>
// kernel: combine_layer_forward.5
$region0: #{combine_layer_forward.5}
  #allocation0 [shape = 'u32[]', space=smem, size = 0x4, offset = 0x4, fixed_abs, tag = 'smem constant byte address 0x4 - core index']
  #allocation1 [shape = 'u32[144,128]{1,0:T(1,128)}', space=vmem, size = 0x12000, scoped, tag = 'internal scratch']
  #allocation2 [shape = 'f32[16,32]{1,0:T(8,128)}', space=vmem, size = 0x2000, scoped, tag = 'scratch operand']
  %s0 = inlined_call_operand.vmem [shape: f32[16,32], index: 0, kind: input, shape index: {}]
  %s1 = inlined_call_operand.vmem [shape: bf16[32,64], index: 1, kind: input, shape index: {}]
  %s2 = inlined_call_operand.vmem [shape: f32[1,64], index: 2, kind: input, shape index: {}]
  %s3 = inlined_call_operand.vmem [shape: bf16[64,32], index: 3, kind: input, shape index: {}]
  %s4 = inlined_call_operand.vmem [shape: f32[1,32], index: 4, kind: input, shape index: {}]
  %s5 = inlined_call_operand.vmem [shape: f32[1,32], index: 5, kind: input, shape index: {}]
  %s6 = inlined_call_operand.vmem [shape: f32[1,32], index: 6, kind: input, shape index: {}]
  %s7 = inlined_call_operand.vmem [shape: f32[16,32], index: 7, kind: output, shape index: {}]
  %s8 = sld [smem:[#allocation0]]
  $region46: #{combine_layer_forward.5} parent=0
    _
  %s10 = ssub.s32 1, %s8
  %s11 = scalar_select 0, %s10, %s8
  // Predicated region
  $region2: #{combine_layer_forward.5} parent=0 // pred_check
    _
  $region3: #{combine_layer_forward.5} parent=0 // pred_check_branch
    %13 = sbr.rel (0) target = $region5
  $region4: #{combine_layer_forward.5} parent=0 // pred_region
    _
  $region5: #{combine_layer_forward.5} parent=0 // pred_fallthru
    _
  // Predicated region
  $region6: #{combine_layer_forward.5} parent=0 // pred_check
    _
  $region7: #{combine_layer_forward.5} parent=0 // pred_check_branch
    %15 = sbr.rel (0) target = $region9
  $region8: #{combine_layer_forward.5} parent=0 // pred_region
    _
  $region9: #{combine_layer_forward.5} parent=0 // pred_fallthru
    _
  // Predicated region
  $region10: #{combine_layer_forward.5} parent=0 // pred_check
    _
  $region11: #{combine_layer_forward.5} parent=0 // pred_check_branch
    %17 = sbr.rel (0) target = $region13
  $region12: #{combine_layer_forward.5} parent=0 // pred_region
    _
  $region13: #{combine_layer_forward.5} parent=0 // pred_fallthru
    _
  // Predicated region
  $region14: #{combine_layer_forward.5} parent=0 // pred_check
    _
  $region15: #{combine_layer_forward.5} parent=0 // pred_check_branch
    %19 = sbr.rel (0) target = $region17
  $region16: #{combine_layer_forward.5} parent=0 // pred_region
    _
  $region17: #{combine_layer_forward.5} parent=0 // pred_fallthru
    _
  // Predicated region
  $region18: #{combine_layer_forward.5} parent=0 // pred_check
    _
  $region19: #{combine_layer_forward.5} parent=0 // pred_check_branch
    %21 = sbr.rel (0) target = $region21
  $region20: #{combine_layer_forward.5} parent=0 // pred_region
    _
  $region21: #{combine_layer_forward.5} parent=0 // pred_fallthru
    _
  // Predicated region
  $region22: #{combine_layer_forward.5} parent=0 // pred_check
    _
  $region23: #{combine_layer_forward.5} parent=0 // pred_check_branch
    %23 = sbr.rel (0) target = $region25
  $region24: #{combine_layer_forward.5} parent=0 // pred_region
    _
  $region25: #{combine_layer_forward.5} parent=0 // pred_fallthru
    _
  // Predicated region
  $region26: #{combine_layer_forward.5} parent=0 // pred_check
    _
  $region27: #{combine_layer_forward.5} parent=0 // pred_check_branch
    %25 = sbr.rel (0) target = $region29
  $region28: #{combine_layer_forward.5} parent=0 // pred_region
    _
  $region29: #{combine_layer_forward.5} parent=0 // pred_fallthru
    _
  %p27 = scmp.eq.s32.totalorder 0, 0
  // Predicated region
  $region30: #{combine_layer_forward.5} parent=0 // pred_check
    %p28 = pneg %p27
  $region31: #{combine_layer_forward.5} parent=0 // pred_check_branch
    %30 = sbr.rel (%p28) target = $region33
  $region32: #{combine_layer_forward.5} parent=0 // pred_region
    %vm31 = vcmask 261120
    %32 = vst.msk [vmem:[#allocation2] sm:$0xff] %vm31, 0.0
    %33 = vst.msk [vmem:[#allocation2 + $0x8] sm:$0xff] %vm31, 0.0
  $region33: #{combine_layer_forward.5} parent=0 // pred_fallthru
    _
  %v34 = vld [vmem:[%s0] sm:$0xff]
  %v35 = vld [vmem:[%s0 + $0x8] sm:$0xff]
  %v36 = vpack.c.bf16 %v35, %v34
  %v37 = vld [vmem:[%s1] sm:$0xf]
  %v38 = vld [vmem:[%s1 + $0x4] sm:$0xf]
  %v39 = vld [vmem:[%s1 + $0x8] sm:$0xf]
  %v40 = vld [vmem:[%s1 + $0xc] sm:$0xf]
  %v41 = vld [vmem:[%s2] sm:$0x1]
  %v43 = vlaneseq
  %v44 = vshrl.u32 %v43, 7
  %v45 = vsub.s32 0, %v44
  %v46 = vrot.slane %v41, %v45
  %v52 = vunpack.c.l.b16 %v37
  %v53 = vunpack.c.l.b16 %v38
  %v54 = vunpack.c.l.b16 %v39
  %v55 = vunpack.c.l.b16 %v40
  %v56 = vpack.c.b16 %v53, %v52
  %v57 = vpack.c.b16 %v55, %v54
  %vm60 = vcmask 261120
  %v62 = vsel %vm60, %v36, 0
  %64 = vmatprep.subr.bf16.mxu0 0
  %65 = vmatpush1.bf16.msra.mxu0 %v56
  %66 = vmatprep.subr.bf16.mxu0 0
  %67 = vmatpush1.bf16.msra.mxu0 %v57
  %68 = vmatprep.subr.bf16.mxu0 0
  %69 = vmatpush1.bf16.msra.mxu0 0
  %70 = vmatprep.subr.bf16.mxu0 0
  %71 = vmatpush1.bf16.msra.mxu0 0
  %72 = vmatprep.subr.bf16.mxu0 0
  %73 = vmatpush1.bf16.msra.mxu0 0
  %74 = vmatprep.subr.bf16.mxu0 0
  %75 = vmatpush1.bf16.msra.mxu0 0
  %76 = vmatprep.subr.bf16.mxu0 0
  %77 = vmatpush1.bf16.msra.mxu0 0
  %78 = vmatprep.subr.bf16.mxu0 0
  %79 = vmatpush1.bf16.msra.mxu0 0
  %80 = vmatprep.subr.bf16.mxu0 0
  %81 = vmatpush1.bf16.msra.mxu0 0
  %82 = vmatprep.subr.bf16.mxu0 0
  %83 = vmatpush1.bf16.msra.mxu0 0
  %84 = vmatprep.subr.bf16.mxu0 0
  %85 = vmatpush1.bf16.msra.mxu0 0
  %86 = vmatprep.subr.bf16.mxu0 0
  %87 = vmatpush1.bf16.msra.mxu0 0
  %88 = vmatprep.subr.bf16.mxu0 0
  %89 = vmatpush1.bf16.msra.mxu0 0
  %90 = vmatprep.subr.bf16.mxu0 0
  %91 = vmatpush1.bf16.msra.mxu0 0
  %92 = vmatprep.subr.bf16.mxu0 0
  %93 = vmatpush1.bf16.msra.mxu0 0
  %94 = vmatprep.subr.bf16.mxu0 0
  %95 = vmatpush1.bf16.msra.mxu0 0
  %96 = vmatprep.mubr.bf16.mxu0 0
  %97 = vmatmul.mubr.bf16.gmra.mrb[0].mxu0 %v62
  %v98 = vpop.f32.mrb[0].mxu0
  %v99 = vadd.f32 %v46, %v98
  %v100 = vpop.f32.mrb[0].mxu0
  %v101 = vpop.f32.mrb[0].mxu0
  %v102 = vadd.f32 %v46, %v101
  %v103 = vpop.f32.mrb[0].mxu0
  %104 = vdwg.mxu0
  %v105 = vmul.f32 %v99, 0.5
  %v106 = vmul.f32 %v102, 0.5
  %v107 = vmul.f32 %v99, 0.044715
  %v108 = vmul.f32 %v102, 0.044715
  %v109 = vmul.f32 %v107, %v99
  %v110 = vmul.f32 %v108, %v102
  %v111 = vmul.f32 %v109, %v99
  %v112 = vmul.f32 %v110, %v102
  %v113 = vadd.f32 %v99, %v111
  %v114 = vadd.f32 %v102, %v112
  %v115 = vmul.f32 %v113, 0.7978846
  %v116 = vmul.f32 %v114, 0.7978846
  %v117 = vtanh.pop %v115
  %v118 = vtanh.pop %v116
  %v119 = vadd.f32 %v117, 1.0
  %v120 = vadd.f32 %v118, 1.0
  %v121 = vmul.f32 %v105, %v119
  %v122 = vmul.f32 %v106, %v120
  %v123 = vld [vmem:[#allocation2] sm:$0xff]
  %v124 = vld [vmem:[#allocation2 + $0x8] sm:$0xff]
  %v125 = vpack.c.bf16 %v122, %v121
  %v126 = vld [vmem:[%s3] sm:$0xf]
  %v127 = vld [vmem:[%s3 + $0x4] sm:$0xf]
  %v128 = vld [vmem:[%s3 + $0x8] sm:$0xf]
  %v129 = vld [vmem:[%s3 + $0xc] sm:$0xf]
  %v130 = vld [vmem:[%s3 + $0x10] sm:$0xf]
  %v131 = vld [vmem:[%s3 + $0x14] sm:$0xf]
  %v132 = vld [vmem:[%s3 + $0x18] sm:$0xf]
  %v133 = vld [vmem:[%s3 + $0x1c] sm:$0xf]
  %v142 = vunpack.c.l.b16 %v126
  %v143 = vunpack.c.l.b16 %v127
  %v144 = vunpack.c.l.b16 %v128
  %v145 = vunpack.c.l.b16 %v129
  %v146 = vunpack.c.l.b16 %v130
  %v147 = vunpack.c.l.b16 %v131
  %v148 = vunpack.c.l.b16 %v132
  %v149 = vunpack.c.l.b16 %v133
  %v150 = vpack.c.b16 %v143, %v142
  %v151 = vpack.c.b16 %v145, %v144
  %v152 = vpack.c.b16 %v147, %v146
  %v153 = vpack.c.b16 %v149, %v148
  %vm158 = vcmask 523264
  %v160 = vsel %vm158, %v125, 0
  %162 = vmatprep.subr.bf16.mxu0 0
  %163 = vmatpush1.bf16.msra.mxu0 %v150
  %164 = vmatprep.subr.bf16.mxu0 0
  %165 = vmatpush1.bf16.msra.mxu0 %v151
  %166 = vmatprep.subr.bf16.mxu0 0
  %167 = vmatpush1.bf16.msra.mxu0 %v152
  %168 = vmatprep.subr.bf16.mxu0 0
  %169 = vmatpush1.bf16.msra.mxu0 %v153
  %170 = vmatprep.subr.bf16.mxu0 0
  %171 = vmatpush1.bf16.msra.mxu0 0
  %172 = vmatprep.subr.bf16.mxu0 0
  %173 = vmatpush1.bf16.msra.mxu0 0
  %174 = vmatprep.subr.bf16.mxu0 0
  %175 = vmatpush1.bf16.msra.mxu0 0
  %176 = vmatprep.subr.bf16.mxu0 0
  %177 = vmatpush1.bf16.msra.mxu0 0
  %178 = vmatprep.subr.bf16.mxu0 0
  %179 = vmatpush1.bf16.msra.mxu0 0
  %180 = vmatprep.subr.bf16.mxu0 0
  %181 = vmatpush1.bf16.msra.mxu0 0
  %182 = vmatprep.subr.bf16.mxu0 0
  %183 = vmatpush1.bf16.msra.mxu0 0
  %184 = vmatprep.subr.bf16.mxu0 0
  %185 = vmatpush1.bf16.msra.mxu0 0
  %186 = vmatprep.subr.bf16.mxu0 0
  %187 = vmatpush1.bf16.msra.mxu0 0
  %188 = vmatprep.subr.bf16.mxu0 0
  %189 = vmatpush1.bf16.msra.mxu0 0
  %190 = vmatprep.subr.bf16.mxu0 0
  %191 = vmatpush1.bf16.msra.mxu0 0
  %192 = vmatprep.subr.bf16.mxu0 0
  %193 = vmatpush1.bf16.msra.mxu0 0
  %194 = vmatprep.mubr.bf16.mxu0 0
  %195 = vmatmul.mubr.bf16.gmra.mrb[0].mxu0 %v160
  %v196 = vpop.f32.mrb[0].mxu0
  %v197 = vadd.f32 0.0, %v196
  %v198 = vpop.f32.mrb[0].mxu0
  %v199 = vpop.f32.mrb[0].mxu0
  %v200 = vadd.f32 0.0, %v199
  %v201 = vpop.f32.mrb[0].mxu0
  %202 = vdwg.mxu0
  %v203 = vadd.f32 %v123, %v197
  %v204 = vadd.f32 %v124, %v200
  %205 = vst.msk [vmem:[#allocation2] sm:$0xff] %vm60, %v203
  %206 = vst.msk [vmem:[#allocation2 + $0x8] sm:$0xff] %vm60, %v204
  // Predicated region
  $region34: #{combine_layer_forward.5} parent=0 // pred_check
    %p207 = pneg %p27
  $region35: #{combine_layer_forward.5} parent=0 // pred_check_branch
    %209 = sbr.rel (%p207) target = $region37
  $region36: #{combine_layer_forward.5} parent=0 // pred_region
    %v210 = vld [vmem:[#allocation2] sm:$0xff]
    %v211 = vld [vmem:[#allocation2 + $0x8] sm:$0xff]
    %v212 = vld [vmem:[%s4] sm:$0x1]
    %v214 = vlaneseq
    %v215 = vshrl.u32 %v214, 7
    %v216 = vsub.s32 0, %v215
    %v217 = vrot.slane %v212, %v216
    %v219 = vadd.f32 %v210, %v217
    %v220 = vadd.f32 %v211, %v217
    %v221 = vld [vmem:[%s0] sm:$0xff]
    %v222 = vld [vmem:[%s0 + $0x8] sm:$0xff]
    %v223 = vadd.f32 %v219, %v221
    %v224 = vadd.f32 %v220, %v222
    %v225 = vld [vmem:[%s5] sm:$0x1]
    %v226 = vld [vmem:[%s6] sm:$0x1]
    %v227 = vsel %vm60, %v223, 0.0
    %228 = vadd.xlane.f32.xlu0 %v227
    %v229 = vpop.xlane.xlu0 %228
    %v230 = vsel %vm60, %v224, 0.0
    %231 = vadd.xlane.f32.xlu0 %v230
    %v232 = vpop.xlane.xlu0 %231
    %v233 = vrcp.pop 32.0
    %v234 = vmul.f32 %v229, %v233
    %v235 = vmul.f32 %v232, %v233
    %v236 = vsub.f32 %v223, %v234
    %v237 = vsub.f32 %v224, %v235
    %v238 = vmul.f32 %v236, %v236
    %v239 = vmul.f32 %v237, %v237
    %v240 = vsel %vm60, %v238, 0.0
    %241 = vadd.xlane.f32.xlu0 %v240
    %v242 = vpop.xlane.xlu0 %241
    %v243 = vsel %vm60, %v239, 0.0
    %244 = vadd.xlane.f32.xlu0 %v243
    %v245 = vpop.xlane.xlu0 %244
    %v246 = vmul.f32 %v242, %v233
    %v247 = vmul.f32 %v245, %v233
    %v248 = vadd.f32 %v246, 1e-12
    %v249 = vadd.f32 %v247, 1e-12
    %v250 = vrsqrt.pop %v248
    %v251 = vrsqrt.pop %v249
    %v252 = vmul.f32 %v236, %v250
    %v253 = vmul.f32 %v237, %v251
    %v255 = vlaneseq
    %v256 = vshrl.u32 %v255, 7
    %v257 = vsub.s32 0, %v256
    %v258 = vrot.slane %v225, %v257
    %v260 = vmul.f32 %v252, %v258
    %v261 = vmul.f32 %v253, %v258
    %v263 = vlaneseq
    %v264 = vshrl.u32 %v263, 7
    %v265 = vsub.s32 0, %v264
    %v266 = vrot.slane %v226, %v265
    %v268 = vadd.f32 %v260, %v266
    %v269 = vadd.f32 %v261, %v266
    %270 = vst.msk [vmem:[%s7] sm:$0xff] %vm60, %v268
    %271 = vst.msk [vmem:[%s7 + $0x8] sm:$0xff] %vm60, %v269
  $region37: #{combine_layer_forward.5} parent=0 // pred_fallthru
    _
  // Predicated region
  $region38: #{combine_layer_forward.5} parent=0 // pred_check
    _
  $region39: #{combine_layer_forward.5} parent=0 // pred_check_branch
    %273 = sbr.rel (0) target = $region41
  $region40: #{combine_layer_forward.5} parent=0 // pred_region
    _
  $region41: #{combine_layer_forward.5} parent=0 // pred_fallthru
    _
  // Predicated region
  $region42: #{combine_layer_forward.5} parent=0 // pred_check
    _
  $region43: #{combine_layer_forward.5} parent=0 // pred_check_branch
    %275 = sbr.rel (0) target = $region45
  $region44: #{combine_layer_forward.5} parent=0 // pred_region
    _
  $region45: #{combine_layer_forward.5} parent=0 // pred_fallthru
    _

// kernel: combine_layer_forward.9
$region0: #{combine_layer_forward.9}
  #allocation0 [shape = 'u32[]', space=smem, size = 0x4, offset = 0x4, fixed_abs, tag = 'smem constant byte address 0x4 - core index']
  #allocation1 [shape = 'u32[144,128]{1,0:T(1,128)}', space=vmem, size = 0x12000, scoped, tag = 'internal scratch']
  #allocation2 [shape = 'f32[16,32]{1,0:T(8,128)}', space=vmem, size = 0x2000, scoped, tag = 'scratch operand']
  %s0 = inlined_call_operand.vmem [shape: f32[16,32], index: 0, kind: input, shape index: {}]
  %s1 = inlined_call_operand.vmem [shape: bf16[32,64], index: 1, kind: input, shape index: {}]
  %s2 = inlined_call_operand.vmem [shape: f32[1,64], index: 2, kind: input, shape index: {}]
  %s3 = inlined_call_operand.vmem [shape: bf16[64,32], index: 3, kind: input, shape index: {}]
  %s4 = inlined_call_operand.vmem [shape: f32[1,32], index: 4, kind: input, shape index: {}]
  %s5 = inlined_call_operand.vmem [shape: f32[1,32], index: 5, kind: input, shape index: {}]
  %s6 = inlined_call_operand.vmem [shape: f32[1,32], index: 6, kind: input, shape index: {}]
  %s7 = inlined_call_operand.hbm [shape: f32[16,32], index: 7, kind: output, shape index: {}]
  %s8 = sld [smem:[#allocation0]]
  $region46: #{combine_layer_forward.9} parent=0
    _
  %s10 = ssub.s32 1, %s8
  %s11 = scalar_select 0, %s10, %s8
  $region1: #{combine_layer_forward.9} parent=0
    #allocation3 [shape = 'u8[8192]{0}', space=vmem, size = 0x2000, scoped, tag = 'output window, operand 0, single buffered']
    #allocation4 [shape = 's32[1]{0}', space=sflag, size = 0x4, scoped, tag = 'scoped memory for combine_layer_forward.9']
    %12 = vsyncpa [#allocation4], 0
    // Predicated region
    $region2: #{combine_layer_forward.9} parent=1 // pred_check
      _
    $region3: #{combine_layer_forward.9} parent=1 // pred_check_branch
      %14 = sbr.rel (0) target = $region5
    $region4: #{combine_layer_forward.9} parent=1 // pred_region
      _
    $region5: #{combine_layer_forward.9} parent=1 // pred_fallthru
      _
    // Predicated region
    $region6: #{combine_layer_forward.9} parent=1 // pred_check
      _
    $region7: #{combine_layer_forward.9} parent=1 // pred_check_branch
      %16 = sbr.rel (0) target = $region9
    $region8: #{combine_layer_forward.9} parent=1 // pred_region
      _
    $region9: #{combine_layer_forward.9} parent=1 // pred_fallthru
      _
    // Predicated region
    $region10: #{combine_layer_forward.9} parent=1 // pred_check
      _
    $region11: #{combine_layer_forward.9} parent=1 // pred_check_branch
      %18 = sbr.rel (0) target = $region13
    $region12: #{combine_layer_forward.9} parent=1 // pred_region
      _
    $region13: #{combine_layer_forward.9} parent=1 // pred_fallthru
      _
    // Predicated region
    $region14: #{combine_layer_forward.9} parent=1 // pred_check
      _
    $region15: #{combine_layer_forward.9} parent=1 // pred_check_branch
      %20 = sbr.rel (0) target = $region17
    $region16: #{combine_layer_forward.9} parent=1 // pred_region
      _
    $region17: #{combine_layer_forward.9} parent=1 // pred_fallthru
      _
    // Predicated region
    $region18: #{combine_layer_forward.9} parent=1 // pred_check
      _
    $region19: #{combine_layer_forward.9} parent=1 // pred_check_branch
      %22 = sbr.rel (0) target = $region21
    $region20: #{combine_layer_forward.9} parent=1 // pred_region
      _
    $region21: #{combine_layer_forward.9} parent=1 // pred_fallthru
      _
    // Predicated region
    $region22: #{combine_layer_forward.9} parent=1 // pred_check
      _
    $region23: #{combine_layer_forward.9} parent=1 // pred_check_branch
      %24 = sbr.rel (0) target = $region25
    $region24: #{combine_layer_forward.9} parent=1 // pred_region
      _
    $region25: #{combine_layer_forward.9} parent=1 // pred_fallthru
      _
    // Predicated region
    $region26: #{combine_layer_forward.9} parent=1 // pred_check
      _
    $region27: #{combine_layer_forward.9} parent=1 // pred_check_branch
      %26 = sbr.rel (0) target = $region29
    $region28: #{combine_layer_forward.9} parent=1 // pred_region
      _
    $region29: #{combine_layer_forward.9} parent=1 // pred_fallthru
      _
    %p28 = scmp.eq.s32.totalorder 0, 0
    // Predicated region
    $region30: #{combine_layer_forward.9} parent=1 // pred_check
      %p29 = pneg %p28
    $region31: #{combine_layer_forward.9} parent=1 // pred_check_branch
      %31 = sbr.rel (%p29) target = $region33
    $region32: #{combine_layer_forward.9} parent=1 // pred_region
      %vm32 = vcmask 261120
      %33 = vst.msk [vmem:[#allocation2] sm:$0xff] %vm32, 0.0
      %34 = vst.msk [vmem:[#allocation2 + $0x8] sm:$0xff] %vm32, 0.0
    $region33: #{combine_layer_forward.9} parent=1 // pred_fallthru
      _
    %v35 = vld [vmem:[%s0] sm:$0xff]
    %v36 = vld [vmem:[%s0 + $0x8] sm:$0xff]
    %v37 = vpack.c.bf16 %v36, %v35
    %v38 = vld [vmem:[%s1] sm:$0xf]
    %v39 = vld [vmem:[%s1 + $0x4] sm:$0xf]
    %v40 = vld [vmem:[%s1 + $0x8] sm:$0xf]
    %v41 = vld [vmem:[%s1 + $0xc] sm:$0xf]
    %v42 = vld [vmem:[%s2] sm:$0x1]
    %v44 = vlaneseq
    %v45 = vshrl.u32 %v44, 7
    %v46 = vsub.s32 0, %v45
    %v47 = vrot.slane %v42, %v46
    %v53 = vunpack.c.l.b16 %v38
    %v54 = vunpack.c.l.b16 %v39
    %v55 = vunpack.c.l.b16 %v40
    %v56 = vunpack.c.l.b16 %v41
    %v57 = vpack.c.b16 %v54, %v53
    %v58 = vpack.c.b16 %v56, %v55
    %vm61 = vcmask 261120
    %v63 = vsel %vm61, %v37, 0
    %65 = vmatprep.subr.bf16.mxu0 0
    %66 = vmatpush1.bf16.msra.mxu0 %v57
    %67 = vmatprep.subr.bf16.mxu0 0
    %68 = vmatpush1.bf16.msra.mxu0 %v58
    %69 = vmatprep.subr.bf16.mxu0 0
    %70 = vmatpush1.bf16.msra.mxu0 0
    %71 = vmatprep.subr.bf16.mxu0 0
    %72 = vmatpush1.bf16.msra.mxu0 0
    %73 = vmatprep.subr.bf16.mxu0 0
    %74 = vmatpush1.bf16.msra.mxu0 0
    %75 = vmatprep.subr.bf16.mxu0 0
    %76 = vmatpush1.bf16.msra.mxu0 0
    %77 = vmatprep.subr.bf16.mxu0 0
    %78 = vmatpush1.bf16.msra.mxu0 0
    %79 = vmatprep.subr.bf16.mxu0 0
    %80 = vmatpush1.bf16.msra.mxu0 0
    %81 = vmatprep.subr.bf16.mxu0 0
    %82 = vmatpush1.bf16.msra.mxu0 0
    %83 = vmatprep.subr.bf16.mxu0 0
    %84 = vmatpush1.bf16.msra.mxu0 0
    %85 = vmatprep.subr.bf16.mxu0 0
    %86 = vmatpush1.bf16.msra.mxu0 0
    %87 = vmatprep.subr.bf16.mxu0 0
    %88 = vmatpush1.bf16.msra.mxu0 0
    %89 = vmatprep.subr.bf16.mxu0 0
    %90 = vmatpush1.bf16.msra.mxu0 0
    %91 = vmatprep.subr.bf16.mxu0 0
    %92 = vmatpush1.bf16.msra.mxu0 0
    %93 = vmatprep.subr.bf16.mxu0 0
    %94 = vmatpush1.bf16.msra.mxu0 0
    %95 = vmatprep.subr.bf16.mxu0 0
    %96 = vmatpush1.bf16.msra.mxu0 0
    %97 = vmatprep.mubr.bf16.mxu0 0
    %98 = vmatmul.mubr.bf16.gmra.mrb[0].mxu0 %v63
    %v99 = vpop.f32.mrb[0].mxu0
    %v100 = vadd.f32 %v47, %v99
    %v101 = vpop.f32.mrb[0].mxu0
    %v102 = vpop.f32.mrb[0].mxu0
    %v103 = vadd.f32 %v47, %v102
    %v104 = vpop.f32.mrb[0].mxu0
    %105 = vdwg.mxu0
    %v106 = vmul.f32 %v100, 0.5
    %v107 = vmul.f32 %v103, 0.5
    %v108 = vmul.f32 %v100, 0.044715
    %v109 = vmul.f32 %v103, 0.044715
    %v110 = vmul.f32 %v108, %v100
    %v111 = vmul.f32 %v109, %v103
    %v112 = vmul.f32 %v110, %v100
    %v113 = vmul.f32 %v111, %v103
    %v114 = vadd.f32 %v100, %v112
    %v115 = vadd.f32 %v103, %v113
    %v116 = vmul.f32 %v114, 0.7978846
    %v117 = vmul.f32 %v115, 0.7978846
    %v118 = vtanh.pop %v116
    %v119 = vtanh.pop %v117
    %v120 = vadd.f32 %v118, 1.0
    %v121 = vadd.f32 %v119, 1.0
    %v122 = vmul.f32 %v106, %v120
    %v123 = vmul.f32 %v107, %v121
    %v124 = vld [vmem:[#allocation2] sm:$0xff]
    %v125 = vld [vmem:[#allocation2 + $0x8] sm:$0xff]
    %v126 = vpack.c.bf16 %v123, %v122
    %v127 = vld [vmem:[%s3] sm:$0xf]
    %v128 = vld [vmem:[%s3 + $0x4] sm:$0xf]
    %v129 = vld [vmem:[%s3 + $0x8] sm:$0xf]
    %v130 = vld [vmem:[%s3 + $0xc] sm:$0xf]
    %v131 = vld [vmem:[%s3 + $0x10] sm:$0xf]
    %v132 = vld [vmem:[%s3 + $0x14] sm:$0xf]
    %v133 = vld [vmem:[%s3 + $0x18] sm:$0xf]
    %v134 = vld [vmem:[%s3 + $0x1c] sm:$0xf]
    %v143 = vunpack.c.l.b16 %v127
    %v144 = vunpack.c.l.b16 %v128
    %v145 = vunpack.c.l.b16 %v129
    %v146 = vunpack.c.l.b16 %v130
    %v147 = vunpack.c.l.b16 %v131
    %v148 = vunpack.c.l.b16 %v132
    %v149 = vunpack.c.l.b16 %v133
    %v150 = vunpack.c.l.b16 %v134
    %v151 = vpack.c.b16 %v144, %v143
    %v152 = vpack.c.b16 %v146, %v145
    %v153 = vpack.c.b16 %v148, %v147
    %v154 = vpack.c.b16 %v150, %v149
    %vm159 = vcmask 523264
    %v161 = vsel %vm159, %v126, 0
    %163 = vmatprep.subr.bf16.mxu0 0
    %164 = vmatpush1.bf16.msra.mxu0 %v151
    %165 = vmatprep.subr.bf16.mxu0 0
    %166 = vmatpush1.bf16.msra.mxu0 %v152
    %167 = vmatprep.subr.bf16.mxu0 0
    %168 = vmatpush1.bf16.msra.mxu0 %v153
    %169 = vmatprep.subr.bf16.mxu0 0
    %170 = vmatpush1.bf16.msra.mxu0 %v154
    %171 = vmatprep.subr.bf16.mxu0 0
    %172 = vmatpush1.bf16.msra.mxu0 0
    %173 = vmatprep.subr.bf16.mxu0 0
    %174 = vmatpush1.bf16.msra.mxu0 0
    %175 = vmatprep.subr.bf16.mxu0 0
    %176 = vmatpush1.bf16.msra.mxu0 0
    %177 = vmatprep.subr.bf16.mxu0 0
    %178 = vmatpush1.bf16.msra.mxu0 0
    %179 = vmatprep.subr.bf16.mxu0 0
    %180 = vmatpush1.bf16.msra.mxu0 0
    %181 = vmatprep.subr.bf16.mxu0 0
    %182 = vmatpush1.bf16.msra.mxu0 0
    %183 = vmatprep.subr.bf16.mxu0 0
    %184 = vmatpush1.bf16.msra.mxu0 0
    %185 = vmatprep.subr.bf16.mxu0 0
    %186 = vmatpush1.bf16.msra.mxu0 0
    %187 = vmatprep.subr.bf16.mxu0 0
    %188 = vmatpush1.bf16.msra.mxu0 0
    %189 = vmatprep.subr.bf16.mxu0 0
    %190 = vmatpush1.bf16.msra.mxu0 0
    %191 = vmatprep.subr.bf16.mxu0 0
    %192 = vmatpush1.bf16.msra.mxu0 0
    %193 = vmatprep.subr.bf16.mxu0 0
    %194 = vmatpush1.bf16.msra.mxu0 0
    %195 = vmatprep.mubr.bf16.mxu0 0
    %196 = vmatmul.mubr.bf16.gmra.mrb[0].mxu0 %v161
    %v197 = vpop.f32.mrb[0].mxu0
    %v198 = vadd.f32 0.0, %v197
    %v199 = vpop.f32.mrb[0].mxu0
    %v200 = vpop.f32.mrb[0].mxu0
    %v201 = vadd.f32 0.0, %v200
    %v202 = vpop.f32.mrb[0].mxu0
    %203 = vdwg.mxu0
    %v204 = vadd.f32 %v124, %v198
    %v205 = vadd.f32 %v125, %v201
    %206 = vst.msk [vmem:[#allocation2] sm:$0xff] %vm61, %v204
    %207 = vst.msk [vmem:[#allocation2 + $0x8] sm:$0xff] %vm61, %v205
    // Predicated region
    $region34: #{combine_layer_forward.9} parent=1 // pred_check
      %p208 = pneg %p28
    $region35: #{combine_layer_forward.9} parent=1 // pred_check_branch
      %210 = sbr.rel (%p208) target = $region37
    $region36: #{combine_layer_forward.9} parent=1 // pred_region
      %v211 = vld [vmem:[#allocation2] sm:$0xff]
      %v212 = vld [vmem:[#allocation2 + $0x8] sm:$0xff]
      %v213 = vld [vmem:[%s4] sm:$0x1]
      %v215 = vlaneseq
      %v216 = vshrl.u32 %v215, 7
      %v217 = vsub.s32 0, %v216
      %v218 = vrot.slane %v213, %v217
      %v220 = vadd.f32 %v211, %v218
      %v221 = vadd.f32 %v212, %v218
      %v222 = vld [vmem:[%s0] sm:$0xff]
      %v223 = vld [vmem:[%s0 + $0x8] sm:$0xff]
      %v224 = vadd.f32 %v220, %v222
      %v225 = vadd.f32 %v221, %v223
      %v226 = vld [vmem:[%s5] sm:$0x1]
      %v227 = vld [vmem:[%s6] sm:$0x1]
      %v228 = vsel %vm61, %v224, 0.0
      %229 = vadd.xlane.f32.xlu0 %v228
      %v230 = vpop.xlane.xlu0 %229
      %v231 = vsel %vm61, %v225, 0.0
      %232 = vadd.xlane.f32.xlu0 %v231
      %v233 = vpop.xlane.xlu0 %232
      %v234 = vrcp.pop 32.0
      %v235 = vmul.f32 %v230, %v234
      %v236 = vmul.f32 %v233, %v234
      %v237 = vsub.f32 %v224, %v235
      %v238 = vsub.f32 %v225, %v236
      %v239 = vmul.f32 %v237, %v237
      %v240 = vmul.f32 %v238, %v238
      %v241 = vsel %vm61, %v239, 0.0
      %242 = vadd.xlane.f32.xlu0 %v241
      %v243 = vpop.xlane.xlu0 %242
      %v244 = vsel %vm61, %v240, 0.0
      %245 = vadd.xlane.f32.xlu0 %v244
      %v246 = vpop.xlane.xlu0 %245
      %v247 = vmul.f32 %v243, %v234
      %v248 = vmul.f32 %v246, %v234
      %v249 = vadd.f32 %v247, 1e-12
      %v250 = vadd.f32 %v248, 1e-12
      %v251 = vrsqrt.pop %v249
      %v252 = vrsqrt.pop %v250
      %v253 = vmul.f32 %v237, %v251
      %v254 = vmul.f32 %v238, %v252
      %v256 = vlaneseq
      %v257 = vshrl.u32 %v256, 7
      %v258 = vsub.s32 0, %v257
      %v259 = vrot.slane %v226, %v258
      %v261 = vmul.f32 %v253, %v259
      %v262 = vmul.f32 %v254, %v259
      %v264 = vlaneseq
      %v265 = vshrl.u32 %v264, 7
      %v266 = vsub.s32 0, %v265
      %v267 = vrot.slane %v227, %v266
      %v269 = vadd.f32 %v261, %v267
      %v270 = vadd.f32 %v262, %v267
      %271 = vst.msk [vmem:[#allocation3] sm:$0xff] %vm61, %v269
      %272 = vst.msk [vmem:[#allocation3 + $0x8] sm:$0xff] %vm61, %v270
    $region37: #{combine_layer_forward.9} parent=1 // pred_fallthru
      _
    // Predicated region
    $region38: #{combine_layer_forward.9} parent=1 // pred_check
      _
    $region39: #{combine_layer_forward.9} parent=1 // pred_check_branch
      %274 = sbr.rel (0) target = $region41
    $region40: #{combine_layer_forward.9} parent=1 // pred_region
      %s276 = ssub.s32 256, 256
      %277 = vsyncadd [#allocation4], %s276
      %s278 = sshll.u32 [#allocation3], 4
      %s279 = int_to_ptr.vmem [resolvable:$true] %s278
      %284 = dma.vmem_to_hbm [thread:$0]  %s279, 256, %s7, [#allocation4], 128, 128, 8
    $region41: #{combine_layer_forward.9} parent=1 // pred_fallthru
      _
    // Predicated region
    $region42: #{combine_layer_forward.9} parent=1 // pred_check
      _
    $region43: #{combine_layer_forward.9} parent=1 // pred_check_branch
      %286 = sbr.rel (0) target = $region45
    $region44: #{combine_layer_forward.9} parent=1 // pred_region
      %287 = dma.done [#allocation4], 256
    $region45: #{combine_layer_forward.9} parent=1 // pred_fallthru
      _
    %288 = vsyncpa [#allocation4], 1

// kernel: combine_layer_forward.6
$region0: #{combine_layer_forward.6}
  #allocation0 [shape = 'u32[]', space=smem, size = 0x4, offset = 0x4, fixed_abs, tag = 'smem constant byte address 0x4 - core index']
  #allocation1 [shape = 'u32[144,128]{1,0:T(1,128)}', space=vmem, size = 0x12000, scoped, tag = 'internal scratch']
  #allocation2 [shape = 'f32[8,32]{1,0:T(8,128)}', space=vmem, size = 0x1000, scoped, tag = 'scratch operand']
  %s0 = inlined_call_operand.vmem [shape: f32[2,8,32], index: 0, kind: input, shape index: {}]
  %s1 = inlined_call_operand.vmem [shape: f32[2,1,8], index: 1, kind: input, shape index: {}]
  %s2 = inlined_call_operand.vmem [shape: bf16[4,32,8], index: 2, kind: input, shape index: {}]
  %s3 = inlined_call_operand.vmem [shape: f32[4,1,8], index: 3, kind: input, shape index: {}]
  %s4 = inlined_call_operand.vmem [shape: bf16[4,32,8], index: 4, kind: input, shape index: {}]
  %s5 = inlined_call_operand.vmem [shape: f32[4,1,8], index: 5, kind: input, shape index: {}]
  %s6 = inlined_call_operand.vmem [shape: bf16[4,32,8], index: 6, kind: input, shape index: {}]
  %s7 = inlined_call_operand.vmem [shape: f32[4,1,8], index: 7, kind: input, shape index: {}]
  %s8 = inlined_call_operand.vmem [shape: bf16[4,8,32], index: 8, kind: input, shape index: {}]
  %s9 = inlined_call_operand.vmem [shape: f32[1,32], index: 9, kind: input, shape index: {}]
  %s10 = inlined_call_operand.vmem [shape: f32[1,32], index: 10, kind: input, shape index: {}]
  %s11 = inlined_call_operand.vmem [shape: f32[1,32], index: 11, kind: input, shape index: {}]
  %s12 = inlined_call_operand.vmem [shape: f32[2,8,32], index: 12, kind: output, shape index: {}]
  %s13 = sld [smem:[#allocation0]]
  $region89: #{combine_layer_forward.6} parent=0
    _
  %s15 = ssub.s32 1, %s13
  %s16 = scalar_select 0, %s15, %s13
  loop: start=0, step=1, limit=10
  $region2: #{combine_layer_forward.6} parent=0 // loop_pre_header
    _
  $region3: #{combine_layer_forward.6} parent=0 // loop_header
    %s18 = sphi 0, %s22
    %p19 = scmp.ge.s32.totalorder %s18, 10
    %s25 = sphi 0, %s37
    %s26 = sphi 0, %s33
    %s27 = sphi 0, %s25
    %s28 = sphi 0, %s26
    %s29 = sphi 0, %s27
    %s30 = sphi 0, %s28
    %s40 = sphi 0, %s42
    %s43 = sphi 0, %s40
    %s44 = sphi 0, %s43
    %s60 = sphi 0, %s44
    %s66 = sphi 0, %s68
    %s69 = sphi 0, %s66
    %s70 = sphi 0, %s69
    %s86 = sphi 0, %s70
    %s92 = sphi 0, %s94
    %s95 = sphi 0, %s92
    %s96 = sphi 0, %s95
    %s112 = sphi 0, %s96
    %s118 = sphi 0, %s120
    %s121 = sphi 0, %s118
    %s122 = sphi 0, %s121
    %s138 = sphi 0, %s122
    %s144 = sphi 0, %s146
    %s147 = sphi 0, %s144
    %s148 = sphi 0, %s147
    %s164 = sphi 0, %s148
    %s170 = sphi 0, %s172
    %s173 = sphi 0, %s170
    %s174 = sphi 0, %s173
    %s190 = sphi 0, %s174
    %s196 = sphi 0, %s198
    %s199 = sphi 0, %s196
    %s200 = sphi 0, %s199
    %s216 = sphi 0, %s200
    %s222 = sphi 0, %s224
    %s225 = sphi 0, %s222
    %s226 = sphi 0, %s225
    %s242 = sphi 0, %s226
    %s248 = sphi 0, %s250
    %s251 = sphi 0, %s248
    %s252 = sphi 0, %s251
    %s268 = sphi 0, %s252
    %s272 = sphi 0, %s272
    %s274 = sphi 0, %s272
    %s275 = sphi 0, %s274
    %s289 = sphi 0, %s275
    %s293 = sphi 0, %s293
    %s295 = sphi 0, %s293
    %s296 = sphi 0, %s295
    %s310 = sphi 0, %s296
    %s314 = sphi 0, %s314
    %s316 = sphi 0, %s314
    %s317 = sphi 0, %s316
    %s331 = sphi 0, %s317
    %s337 = sphi 0, %s339
    %s340 = sphi 0, %s337
    %s341 = sphi 0, %s340
    %s357 = sphi 0, %s341
  $region4: #{combine_layer_forward.6} parent=0 // loop_header_branch
    %21 = sbr.rel (%p19) target = $region8
  $region5: #{combine_layer_forward.6} parent=0 // loop_body
    %s23 = ssub.s32 %s18, 1
    %s24 = ssub.s32 %s18, 2
    %s31 = sadd.s32 1, %s26
    %p32 = scmp.ge.s32.totalorder %s31, 4
    %s33 = scalar_select %p32, 0, %s31
    %s34 = sadd.s32 1, %s25
    %s35 = scalar_select %p32, %s34, %s25
    %p36 = scmp.ge.s32.totalorder %s35, 2
    %s37 = scalar_select %p36, 0, %s35
    %s38 = ssub.s32 %s25, %s37
    %p39 = scmp.eq.s32.totalorder %s38, 0
    %s41 = sadd.s32 %s40, 1
    %s42 = scalar_select %p39, %s40, %s41
    %p45 = pneg %p39
    %p46 = scmp.eq.s32.totalorder %s18, 7
    %p47 = por %p45, %p46
    %p48 = scmp.ne.s32.totalorder %s40, %s43
    %p49 = scmp.eq.s32.totalorder %s18, 0
    %p50 = por %p48, %p49
    %p51 = scmp.ne.s32.totalorder %s40, %s43
    %p52 = scmp.eq.s32.totalorder %s23, 7
    %p53 = por %p51, %p52
    %p54 = scmp.ne.s32.totalorder %s43, %s44
    %p55 = scmp.eq.s32.totalorder %s23, 0
    %p56 = por %p54, %p55
    %p57 = scmp.ne.s32.totalorder %s43, %s44
    %p58 = scmp.eq.s32.totalorder %s24, 7
    %p59 = por %p57, %p58
    %p61 = scmp.ne.s32.totalorder %s44, %s60
    %p62 = scmp.eq.s32.totalorder %s24, 0
    %p63 = por %p61, %p62
    %s64 = ssub.s32 %s25, %s37
    %p65 = scmp.eq.s32.totalorder %s64, 0
    %s67 = sadd.s32 %s66, 1
    %s68 = scalar_select %p65, %s66, %s67
    %p71 = pneg %p65
    %p72 = scmp.eq.s32.totalorder %s18, 7
    %p73 = por %p71, %p72
    %p74 = scmp.ne.s32.totalorder %s66, %s69
    %p75 = scmp.eq.s32.totalorder %s18, 0
    %p76 = por %p74, %p75
    %p77 = scmp.ne.s32.totalorder %s66, %s69
    %p78 = scmp.eq.s32.totalorder %s23, 7
    %p79 = por %p77, %p78
    %p80 = scmp.ne.s32.totalorder %s69, %s70
    %p81 = scmp.eq.s32.totalorder %s23, 0
    %p82 = por %p80, %p81
    %p83 = scmp.ne.s32.totalorder %s69, %s70
    %p84 = scmp.eq.s32.totalorder %s24, 7
    %p85 = por %p83, %p84
    %p87 = scmp.ne.s32.totalorder %s70, %s86
    %p88 = scmp.eq.s32.totalorder %s24, 0
    %p89 = por %p87, %p88
    %s90 = ssub.s32 %s26, %s33
    %p91 = scmp.eq.s32.totalorder %s90, 0
    %s93 = sadd.s32 %s92, 1
    %s94 = scalar_select %p91, %s92, %s93
    %p97 = pneg %p91
    %p98 = scmp.eq.s32.totalorder %s18, 7
    %p99 = por %p97, %p98
    %p100 = scmp.ne.s32.totalorder %s92, %s95
    %p101 = scmp.eq.s32.totalorder %s18, 0
    %p102 = por %p100, %p101
    %p103 = scmp.ne.s32.totalorder %s92, %s95
    %p104 = scmp.eq.s32.totalorder %s23, 7
    %p105 = por %p103, %p104
    %p106 = scmp.ne.s32.totalorder %s95, %s96
    %p107 = scmp.eq.s32.totalorder %s23, 0
    %p108 = por %p106, %p107
    %p109 = scmp.ne.s32.totalorder %s95, %s96
    %p110 = scmp.eq.s32.totalorder %s24, 7
    %p111 = por %p109, %p110
    %p113 = scmp.ne.s32.totalorder %s96, %s112
    %p114 = scmp.eq.s32.totalorder %s24, 0
    %p115 = por %p113, %p114
    %s116 = ssub.s32 %s26, %s33
    %p117 = scmp.eq.s32.totalorder %s116, 0
    %s119 = sadd.s32 %s118, 1
    %s120 = scalar_select %p117, %s118, %s119
    %p123 = pneg %p117
    %p124 = scmp.eq.s32.totalorder %s18, 7
    %p125 = por %p123, %p124
    %p126 = scmp.ne.s32.totalorder %s118, %s121
    %p127 = scmp.eq.s32.totalorder %s18, 0
    %p128 = por %p126, %p127
    %p129 = scmp.ne.s32.totalorder %s118, %s121
    %p130 = scmp.eq.s32.totalorder %s23, 7
    %p131 = por %p129, %p130
    %p132 = scmp.ne.s32.totalorder %s121, %s122
    %p133 = scmp.eq.s32.totalorder %s23, 0
    %p134 = por %p132, %p133
    %p135 = scmp.ne.s32.totalorder %s121, %s122
    %p136 = scmp.eq.s32.totalorder %s24, 7
    %p137 = por %p135, %p136
    %p139 = scmp.ne.s32.totalorder %s122, %s138
    %p140 = scmp.eq.s32.totalorder %s24, 0
    %p141 = por %p139, %p140
    %s142 = ssub.s32 %s26, %s33
    %p143 = scmp.eq.s32.totalorder %s142, 0
    %s145 = sadd.s32 %s144, 1
    %s146 = scalar_select %p143, %s144, %s145
    %p149 = pneg %p143
    %p150 = scmp.eq.s32.totalorder %s18, 7
    %p151 = por %p149, %p150
    %p152 = scmp.ne.s32.totalorder %s144, %s147
    %p153 = scmp.eq.s32.totalorder %s18, 0
    %p154 = por %p152, %p153
    %p155 = scmp.ne.s32.totalorder %s144, %s147
    %p156 = scmp.eq.s32.totalorder %s23, 7
    %p157 = por %p155, %p156
    %p158 = scmp.ne.s32.totalorder %s147, %s148
    %p159 = scmp.eq.s32.totalorder %s23, 0
    %p160 = por %p158, %p159
    %p161 = scmp.ne.s32.totalorder %s147, %s148
    %p162 = scmp.eq.s32.totalorder %s24, 7
    %p163 = por %p161, %p162
    %p165 = scmp.ne.s32.totalorder %s148, %s164
    %p166 = scmp.eq.s32.totalorder %s24, 0
    %p167 = por %p165, %p166
    %s168 = ssub.s32 %s26, %s33
    %p169 = scmp.eq.s32.totalorder %s168, 0
    %s171 = sadd.s32 %s170, 1
    %s172 = scalar_select %p169, %s170, %s171
    %p175 = pneg %p169
    %p176 = scmp.eq.s32.totalorder %s18, 7
    %p177 = por %p175, %p176
    %p178 = scmp.ne.s32.totalorder %s170, %s173
    %p179 = scmp.eq.s32.totalorder %s18, 0
    %p180 = por %p178, %p179
    %p181 = scmp.ne.s32.totalorder %s170, %s173
    %p182 = scmp.eq.s32.totalorder %s23, 7
    %p183 = por %p181, %p182
    %p184 = scmp.ne.s32.totalorder %s173, %s174
    %p185 = scmp.eq.s32.totalorder %s23, 0
    %p186 = por %p184, %p185
    %p187 = scmp.ne.s32.totalorder %s173, %s174
    %p188 = scmp.eq.s32.totalorder %s24, 7
    %p189 = por %p187, %p188
    %p191 = scmp.ne.s32.totalorder %s174, %s190
    %p192 = scmp.eq.s32.totalorder %s24, 0
    %p193 = por %p191, %p192
    %s194 = ssub.s32 %s26, %s33
    %p195 = scmp.eq.s32.totalorder %s194, 0
    %s197 = sadd.s32 %s196, 1
    %s198 = scalar_select %p195, %s196, %s197
    %p201 = pneg %p195
    %p202 = scmp.eq.s32.totalorder %s18, 7
    %p203 = por %p201, %p202
    %p204 = scmp.ne.s32.totalorder %s196, %s199
    %p205 = scmp.eq.s32.totalorder %s18, 0
    %p206 = por %p204, %p205
    %p207 = scmp.ne.s32.totalorder %s196, %s199
    %p208 = scmp.eq.s32.totalorder %s23, 7
    %p209 = por %p207, %p208
    %p210 = scmp.ne.s32.totalorder %s199, %s200
    %p211 = scmp.eq.s32.totalorder %s23, 0
    %p212 = por %p210, %p211
    %p213 = scmp.ne.s32.totalorder %s199, %s200
    %p214 = scmp.eq.s32.totalorder %s24, 7
    %p215 = por %p213, %p214
    %p217 = scmp.ne.s32.totalorder %s200, %s216
    %p218 = scmp.eq.s32.totalorder %s24, 0
    %p219 = por %p217, %p218
    %s220 = ssub.s32 %s26, %s33
    %p221 = scmp.eq.s32.totalorder %s220, 0
    %s223 = sadd.s32 %s222, 1
    %s224 = scalar_select %p221, %s222, %s223
    %p227 = pneg %p221
    %p228 = scmp.eq.s32.totalorder %s18, 7
    %p229 = por %p227, %p228
    %p230 = scmp.ne.s32.totalorder %s222, %s225
    %p231 = scmp.eq.s32.totalorder %s18, 0
    %p232 = por %p230, %p231
    %p233 = scmp.ne.s32.totalorder %s222, %s225
    %p234 = scmp.eq.s32.totalorder %s23, 7
    %p235 = por %p233, %p234
    %p236 = scmp.ne.s32.totalorder %s225, %s226
    %p237 = scmp.eq.s32.totalorder %s23, 0
    %p238 = por %p236, %p237
    %p239 = scmp.ne.s32.totalorder %s225, %s226
    %p240 = scmp.eq.s32.totalorder %s24, 7
    %p241 = por %p239, %p240
    %p243 = scmp.ne.s32.totalorder %s226, %s242
    %p244 = scmp.eq.s32.totalorder %s24, 0
    %p245 = por %p243, %p244
    %s246 = ssub.s32 %s26, %s33
    %p247 = scmp.eq.s32.totalorder %s246, 0
    %s249 = sadd.s32 %s248, 1
    %s250 = scalar_select %p247, %s248, %s249
    %p253 = pneg %p247
    %p254 = scmp.eq.s32.totalorder %s18, 7
    %p255 = por %p253, %p254
    %p256 = scmp.ne.s32.totalorder %s248, %s251
    %p257 = scmp.eq.s32.totalorder %s18, 0
    %p258 = por %p256, %p257
    %p259 = scmp.ne.s32.totalorder %s248, %s251
    %p260 = scmp.eq.s32.totalorder %s23, 7
    %p261 = por %p259, %p260
    %p262 = scmp.ne.s32.totalorder %s251, %s252
    %p263 = scmp.eq.s32.totalorder %s23, 0
    %p264 = por %p262, %p263
    %p265 = scmp.ne.s32.totalorder %s251, %s252
    %p266 = scmp.eq.s32.totalorder %s24, 7
    %p267 = por %p265, %p266
    %p269 = scmp.ne.s32.totalorder %s252, %s268
    %p270 = scmp.eq.s32.totalorder %s24, 0
    %p271 = por %p269, %p270
    %s273 = sadd.s32 %s272, 1
    %p276 = scmp.eq.s32.totalorder %s18, 7
    %p277 = scmp.ne.s32.totalorder %s272, %s274
    %p278 = scmp.eq.s32.totalorder %s18, 0
    %p279 = por %p277, %p278
    %p280 = scmp.ne.s32.totalorder %s272, %s274
    %p281 = scmp.eq.s32.totalorder %s23, 7
    %p282 = por %p280, %p281
    %p283 = scmp.ne.s32.totalorder %s274, %s275
    %p284 = scmp.eq.s32.totalorder %s23, 0
    %p285 = por %p283, %p284
    %p286 = scmp.ne.s32.totalorder %s274, %s275
    %p287 = scmp.eq.s32.totalorder %s24, 7
    %p288 = por %p286, %p287
    %p290 = scmp.ne.s32.totalorder %s275, %s289
    %p291 = scmp.eq.s32.totalorder %s24, 0
    %p292 = por %p290, %p291
    %s294 = sadd.s32 %s293, 1
    %p297 = scmp.eq.s32.totalorder %s18, 7
    %p298 = scmp.ne.s32.totalorder %s293, %s295
    %p299 = scmp.eq.s32.totalorder %s18, 0
    %p300 = por %p298, %p299
    %p301 = scmp.ne.s32.totalorder %s293, %s295
    %p302 = scmp.eq.s32.totalorder %s23, 7
    %p303 = por %p301, %p302
    %p304 = scmp.ne.s32.totalorder %s295, %s296
    %p305 = scmp.eq.s32.totalorder %s23, 0
    %p306 = por %p304, %p305
    %p307 = scmp.ne.s32.totalorder %s295, %s296
    %p308 = scmp.eq.s32.totalorder %s24, 7
    %p309 = por %p307, %p308
    %p311 = scmp.ne.s32.totalorder %s296, %s310
    %p312 = scmp.eq.s32.totalorder %s24, 0
    %p313 = por %p311, %p312
    %s315 = sadd.s32 %s314, 1
    %p318 = scmp.eq.s32.totalorder %s18, 7
    %p319 = scmp.ne.s32.totalorder %s314, %s316
    %p320 = scmp.eq.s32.totalorder %s18, 0
    %p321 = por %p319, %p320
    %p322 = scmp.ne.s32.totalorder %s314, %s316
    %p323 = scmp.eq.s32.totalorder %s23, 7
    %p324 = por %p322, %p323
    %p325 = scmp.ne.s32.totalorder %s316, %s317
    %p326 = scmp.eq.s32.totalorder %s23, 0
    %p327 = por %p325, %p326
    %p328 = scmp.ne.s32.totalorder %s316, %s317
    %p329 = scmp.eq.s32.totalorder %s24, 7
    %p330 = por %p328, %p329
    %p332 = scmp.ne.s32.totalorder %s317, %s331
    %p333 = scmp.eq.s32.totalorder %s24, 0
    %p334 = por %p332, %p333
    %s335 = ssub.s32 %s25, %s37
    %p336 = scmp.eq.s32.totalorder %s335, 0
    %s338 = sadd.s32 %s337, 1
    %s339 = scalar_select %p336, %s337, %s338
    %p342 = pneg %p336
    %p343 = scmp.eq.s32.totalorder %s18, 7
    %p344 = por %p342, %p343
    %p345 = scmp.ne.s32.totalorder %s337, %s340
    %p346 = scmp.eq.s32.totalorder %s18, 0
    %p347 = por %p345, %p346
    %p348 = scmp.ne.s32.totalorder %s337, %s340
    %p349 = scmp.eq.s32.totalorder %s23, 7
    %p350 = por %p348, %p349
    %p351 = scmp.ne.s32.totalorder %s340, %s341
    %p352 = scmp.eq.s32.totalorder %s23, 0
    %p353 = por %p351, %p352
    %p354 = scmp.ne.s32.totalorder %s340, %s341
    %p355 = scmp.eq.s32.totalorder %s24, 7
    %p356 = por %p354, %p355
    %p358 = scmp.ne.s32.totalorder %s341, %s357
    %p359 = scmp.eq.s32.totalorder %s24, 0
    %p360 = por %p358, %p359
    %p361 = scmp.le.s32.totalorder 1, %s18
    %p362 = scmp.lt.s32.totalorder %s18, 9
    %p363 = pnand %p361, %p362
    %p364 = pneg %p363
    // Predicated region
    $region9: #{combine_layer_forward.6} parent=5 // pred_check
      _
    $region10: #{combine_layer_forward.6} parent=5 // pred_check_branch
      %366 = sbr.rel (%p363) target = $region12
    $region11: #{combine_layer_forward.6} parent=5 // pred_region
      %s367 = ssub.s32 %s18, 1
      // Predicated region
      $region13: #{combine_layer_forward.6} parent=11 // pred_check
        %p368 = pneg %p285
      $region14: #{combine_layer_forward.6} parent=11 // pred_check_branch
        %370 = sbr.rel (%p368) target = $region16
      $region15: #{combine_layer_forward.6} parent=11 // pred_region
        _
      $region16: #{combine_layer_forward.6} parent=11 // pred_fallthru
        _
      // Predicated region
      $region17: #{combine_layer_forward.6} parent=11 // pred_check
        %p371 = pneg %p306
      $region18: #{combine_layer_forward.6} parent=11 // pred_check_branch
        %373 = sbr.rel (%p371) target = $region20
      $region19: #{combine_layer_forward.6} parent=11 // pred_region
        _
      $region20: #{combine_layer_forward.6} parent=11 // pred_fallthru
        _
      // Predicated region
      $region21: #{combine_layer_forward.6} parent=11 // pred_check
        %p374 = pneg %p327
      $region22: #{combine_layer_forward.6} parent=11 // pred_check_branch
        %376 = sbr.rel (%p374) target = $region24
      $region23: #{combine_layer_forward.6} parent=11 // pred_region
        _
      $region24: #{combine_layer_forward.6} parent=11 // pred_fallthru
        _
    $region12: #{combine_layer_forward.6} parent=5 // pred_fallthru
      _
    %p377 = scmp.lt.s32.totalorder %s18, 8
    // Predicated region
    $region25: #{combine_layer_forward.6} parent=5 // pred_check
      %p378 = pneg %p377
    $region26: #{combine_layer_forward.6} parent=5 // pred_check_branch
      %380 = sbr.rel (%p378) target = $region28
    $region27: #{combine_layer_forward.6} parent=5 // pred_region
      // Predicated region
      $region29: #{combine_layer_forward.6} parent=27 // pred_check
        %p381 = pneg %p50
      $region30: #{combine_layer_forward.6} parent=27 // pred_check_branch
        %383 = sbr.rel (%p381) target = $region32
      $region31: #{combine_layer_forward.6} parent=27 // pred_region
        %p384 = scmp.lt.s32.totalorder %s25, 1
        %s385 = scalar_select %p384, %s25, 1
        %s386 = smul.addr %s385, 8
        %s387 = scalar_lea.vmem %s0, %s386
      $region32: #{combine_layer_forward.6} parent=27 // pred_fallthru
        _
      // Predicated region
      $region33: #{combine_layer_forward.6} parent=27 // pred_check
        %p388 = pneg %p76
      $region34: #{combine_layer_forward.6} parent=27 // pred_check_branch
        %390 = sbr.rel (%p388) target = $region36
      $region35: #{combine_layer_forward.6} parent=27 // pred_region
        %p391 = scmp.lt.s32.totalorder %s25, 1
        %s392 = scalar_select %p391, %s25, 1
        %s393 = scalar_lea.vmem %s1, %s392
      $region36: #{combine_layer_forward.6} parent=27 // pred_fallthru
        _
      // Predicated region
      $region37: #{combine_layer_forward.6} parent=27 // pred_check
        %p394 = pneg %p102
      $region38: #{combine_layer_forward.6} parent=27 // pred_check_branch
        %396 = sbr.rel (%p394) target = $region40
      $region39: #{combine_layer_forward.6} parent=27 // pred_region
        %p397 = scmp.lt.s32.totalorder %s26, 3
        %s398 = scalar_select %p397, %s26, 3
        %s399 = smul.addr %s398, 4
        %s400 = smul.addr %s399, 4
        %s401 = scalar_lea.vmem %s2, %s400
      $region40: #{combine_layer_forward.6} parent=27 // pred_fallthru
        _
      // Predicated region
      $region41: #{combine_layer_forward.6} parent=27 // pred_check
        %p402 = pneg %p128
      $region42: #{combine_layer_forward.6} parent=27 // pred_check_branch
        %404 = sbr.rel (%p402) target = $region44
      $region43: #{combine_layer_forward.6} parent=27 // pred_region
        %p405 = scmp.lt.s32.totalorder %s26, 3
        %s406 = scalar_select %p405, %s26, 3
        %s407 = scalar_lea.vmem %s3, %s406
      $region44: #{combine_layer_forward.6} parent=27 // pred_fallthru
        _
      // Predicated region
      $region45: #{combine_layer_forward.6} parent=27 // pred_check
        %p408 = pneg %p154
      $region46: #{combine_layer_forward.6} parent=27 // pred_check_branch
        %410 = sbr.rel (%p408) target = $region48
      $region47: #{combine_layer_forward.6} parent=27 // pred_region
        %p411 = scmp.lt.s32.totalorder %s26, 3
        %s412 = scalar_select %p411, %s26, 3
        %s413 = smul.addr %s412, 4
        %s414 = smul.addr %s413, 4
        %s415 = scalar_lea.vmem %s4, %s414
      $region48: #{combine_layer_forward.6} parent=27 // pred_fallthru
        _
      // Predicated region
      $region49: #{combine_layer_forward.6} parent=27 // pred_check
        %p416 = pneg %p180
      $region50: #{combine_layer_forward.6} parent=27 // pred_check_branch
        %418 = sbr.rel (%p416) target = $region52
      $region51: #{combine_layer_forward.6} parent=27 // pred_region
        %p419 = scmp.lt.s32.totalorder %s26, 3
        %s420 = scalar_select %p419, %s26, 3
        %s421 = scalar_lea.vmem %s5, %s420
      $region52: #{combine_layer_forward.6} parent=27 // pred_fallthru
        _
      // Predicated region
      $region53: #{combine_layer_forward.6} parent=27 // pred_check
        %p422 = pneg %p206
      $region54: #{combine_layer_forward.6} parent=27 // pred_check_branch
        %424 = sbr.rel (%p422) target = $region56
      $region55: #{combine_layer_forward.6} parent=27 // pred_region
        %p425 = scmp.lt.s32.totalorder %s26, 3
        %s426 = scalar_select %p425, %s26, 3
        %s427 = smul.addr %s426, 4
        %s428 = smul.addr %s427, 4
        %s429 = scalar_lea.vmem %s6, %s428
      $region56: #{combine_layer_forward.6} parent=27 // pred_fallthru
        _
      // Predicated region
      $region57: #{combine_layer_forward.6} parent=27 // pred_check
        %p430 = pneg %p232
      $region58: #{combine_layer_forward.6} parent=27 // pred_check_branch
        %432 = sbr.rel (%p430) target = $region60
      $region59: #{combine_layer_forward.6} parent=27 // pred_region
        %p433 = scmp.lt.s32.totalorder %s26, 3
        %s434 = scalar_select %p433, %s26, 3
        %s435 = scalar_lea.vmem %s7, %s434
      $region60: #{combine_layer_forward.6} parent=27 // pred_fallthru
        _
      // Predicated region
      $region61: #{combine_layer_forward.6} parent=27 // pred_check
        %p436 = pneg %p258
      $region62: #{combine_layer_forward.6} parent=27 // pred_check_branch
        %438 = sbr.rel (%p436) target = $region64
      $region63: #{combine_layer_forward.6} parent=27 // pred_region
        %p439 = scmp.lt.s32.totalorder %s26, 3
        %s440 = scalar_select %p439, %s26, 3
        %s441 = smul.addr %s440, 4
        %s442 = scalar_lea.vmem %s8, %s441
      $region64: #{combine_layer_forward.6} parent=27 // pred_fallthru
        _
    $region28: #{combine_layer_forward.6} parent=5 // pred_fallthru
      _
    %p443 = scmp.le.s32.totalorder 1, %s18
    %p444 = scmp.lt.s32.totalorder %s18, 9
    %p445 = pnand %p443, %p444
    %p446 = pneg %p445
    // Predicated region
    $region65: #{combine_layer_forward.6} parent=5 // pred_check
      _
    $region66: #{combine_layer_forward.6} parent=5 // pred_check_branch
      %448 = sbr.rel (%p445) target = $region68
    $region67: #{combine_layer_forward.6} parent=5 // pred_region
      %s449 = ssub.s32 %s18, 1
      %p450 = scmp.lt.s32.totalorder %s27, 1
      %s451 = scalar_select %p450, %s27, 1
      %s452 = smul.addr %s451, 8
      %s453 = scalar_lea.vmem %s0, %s452
      %p454 = pneg %p56
      %p455 = pneg %p53
      %p456 = scmp.lt.s32.totalorder %s27, 1
      %s457 = scalar_select %p456, %s27, 1
      %s458 = scalar_lea.vmem %s1, %s457
      %p459 = pneg %p82
      %p460 = pneg %p79
      %p461 = scmp.lt.s32.totalorder %s28, 3
      %s462 = scalar_select %p461, %s28, 3
      %s463 = smul.addr %s462, 4
      %s464 = smul.addr %s463, 4
      %s465 = scalar_lea.vmem %s2, %s464
      %p466 = pneg %p108
      %p467 = pneg %p105
      %p468 = scmp.lt.s32.totalorder %s28, 3
      %s469 = scalar_select %p468, %s28, 3
      %s470 = scalar_lea.vmem %s3, %s469
      %p471 = pneg %p134
      %p472 = pneg %p131
      %p473 = scmp.lt.s32.totalorder %s28, 3
      %s474 = scalar_select %p473, %s28, 3
      %s475 = smul.addr %s474, 4
      %s476 = smul.addr %s475, 4
      %s477 = scalar_lea.vmem %s4, %s476
      %p478 = pneg %p160
      %p479 = pneg %p157
      %p480 = scmp.lt.s32.totalorder %s28, 3
      %s481 = scalar_select %p480, %s28, 3
      %s482 = scalar_lea.vmem %s5, %s481
      %p483 = pneg %p186
      %p484 = pneg %p183
      %p485 = scmp.lt.s32.totalorder %s28, 3
      %s486 = scalar_select %p485, %s28, 3
      %s487 = smul.addr %s486, 4
      %s488 = smul.addr %s487, 4
      %s489 = scalar_lea.vmem %s6, %s488
      %p490 = pneg %p212
      %p491 = pneg %p209
      %p492 = scmp.lt.s32.totalorder %s28, 3
      %s493 = scalar_select %p492, %s28, 3
      %s494 = scalar_lea.vmem %s7, %s493
      %p495 = pneg %p238
      %p496 = pneg %p235
      %p497 = scmp.lt.s32.totalorder %s28, 3
      %s498 = scalar_select %p497, %s28, 3
      %s499 = smul.addr %s498, 4
      %s500 = scalar_lea.vmem %s8, %s499
      %p501 = pneg %p264
      %p502 = pneg %p261
      %p503 = pneg %p285
      %p504 = pneg %p282
      %p505 = pneg %p306
      %p506 = pneg %p303
      %p507 = pneg %p327
      %p508 = pneg %p324
      %p509 = pneg %p353
      %p510 = pneg %p350
      %p511 = scmp.lt.s32.totalorder %s27, 1
      %s512 = scalar_select %p511, %s27, 1
      %s513 = smul.addr %s512, 8
      %s514 = scalar_lea.vmem %s12, %s513
      %p515 = scmp.lt.s32.totalorder %s27, 1
      %s516 = scalar_select %p515, %s27, 1
      %s517 = smul.addr %s516, 8
      %s518 = scalar_lea.vmem %s0, %s517
      %p519 = scmp.lt.s32.totalorder %s27, 1
      %s520 = scalar_select %p519, %s27, 1
      %s521 = scalar_lea.vmem %s1, %s520
      %p522 = scmp.lt.s32.totalorder %s28, 3
      %s523 = scalar_select %p522, %s28, 3
      %s524 = smul.addr %s523, 4
      %s525 = smul.addr %s524, 4
      %s526 = scalar_lea.vmem %s2, %s525
      %p527 = scmp.lt.s32.totalorder %s28, 3
      %s528 = scalar_select %p527, %s28, 3
      %s529 = scalar_lea.vmem %s3, %s528
      %p530 = scmp.lt.s32.totalorder %s28, 3
      %s531 = scalar_select %p530, %s28, 3
      %s532 = smul.addr %s531, 4
      %s533 = smul.addr %s532, 4
      %s534 = scalar_lea.vmem %s4, %s533
      %p535 = scmp.lt.s32.totalorder %s28, 3
      %s536 = scalar_select %p535, %s28, 3
      %s537 = scalar_lea.vmem %s5, %s536
      %p538 = scmp.lt.s32.totalorder %s28, 3
      %s539 = scalar_select %p538, %s28, 3
      %s540 = smul.addr %s539, 4
      %s541 = smul.addr %s540, 4
      %s542 = scalar_lea.vmem %s6, %s541
      %p543 = scmp.lt.s32.totalorder %s28, 3
      %s544 = scalar_select %p543, %s28, 3
      %s545 = scalar_lea.vmem %s7, %s544
      %p546 = scmp.lt.s32.totalorder %s28, 3
      %s547 = scalar_select %p546, %s28, 3
      %s548 = smul.addr %s547, 4
      %s549 = scalar_lea.vmem %s8, %s548
      %p550 = scmp.lt.s32.totalorder %s27, 1
      %s551 = scalar_select %p550, %s27, 1
      %s552 = smul.addr %s551, 8
      %s553 = scalar_lea.vmem %s12, %s552
      %p555 = scmp.eq.s32.totalorder %s28, 0
      // Predicated region
      $region69: #{combine_layer_forward.6} parent=67 // pred_check
        %p556 = pneg %p555
      $region70: #{combine_layer_forward.6} parent=67 // pred_check_branch
        %558 = sbr.rel (%p556) target = $region72
      $region71: #{combine_layer_forward.6} parent=67 // pred_region
        %vm559 = vcmask 261120
        %560 = vst.msk [vmem:[#allocation2] sm:$0xff] %vm559, 0.0
      $region72: #{combine_layer_forward.6} parent=67 // pred_fallthru
        _
      %v561 = vld [vmem:[%s518] sm:$0xff]
      %v562 = vpack.c.bf16 %v561, %v561
      %v563 = vld [vmem:[%s521] sm:$0x1]
      %v564 = vld [vmem:[%s526] sm:$0xf]
      %v565 = vld [vmem:[%s526 + $0x4] sm:$0xf]
      %v566 = vld [vmem:[%s526 + $0x8] sm:$0xf]
      %v567 = vld [vmem:[%s526 + $0xc] sm:$0xf]
      %v568 = vld [vmem:[%s529] sm:$0x1]
      %v570 = vlaneseq
      %v571 = vshrl.u32 %v570, 7
      %v572 = vsub.s32 0, %v571
      %v573 = vrot.slane %v568, %v572
      %v579 = vunpack.c.l.b16 %v564
      %v580 = vunpack.c.l.b16 %v565
      %v581 = vunpack.c.l.b16 %v566
      %v582 = vunpack.c.l.b16 %v567
      %v583 = vpack.c.b16 %v580, %v579
      %v584 = vpack.c.b16 %v582, %v581
      %vm587 = vcmask 261120
      %v589 = vsel %vm587, %v562, 0
      %591 = vmatprep.subr.bf16.mxu0 0
      %592 = vmatpush1.bf16.msra.mxu0 %v583
      %593 = vmatprep.subr.bf16.mxu0 0
      %594 = vmatpush1.bf16.msra.mxu0 %v584
      %595 = vmatprep.subr.bf16.mxu0 0
      %596 = vmatpush1.bf16.msra.mxu0 0
      %597 = vmatprep.subr.bf16.mxu0 0
      %598 = vmatpush1.bf16.msra.mxu0 0
      %599 = vmatprep.subr.bf16.mxu0 0
      %600 = vmatpush1.bf16.msra.mxu0 0
      %601 = vmatprep.subr.bf16.mxu0 0
      %602 = vmatpush1.bf16.msra.mxu0 0
      %603 = vmatprep.subr.bf16.mxu0 0
      %604 = vmatpush1.bf16.msra.mxu0 0
      %605 = vmatprep.subr.bf16.mxu0 0
      %606 = vmatpush1.bf16.msra.mxu0 0
      %607 = vmatprep.subr.bf16.mxu0 0
      %608 = vmatpush1.bf16.msra.mxu0 0
      %609 = vmatprep.subr.bf16.mxu0 0
      %610 = vmatpush1.bf16.msra.mxu0 0
      %611 = vmatprep.subr.bf16.mxu0 0
      %612 = vmatpush1.bf16.msra.mxu0 0
      %613 = vmatprep.subr.bf16.mxu0 0
      %614 = vmatpush1.bf16.msra.mxu0 0
      %615 = vmatprep.subr.bf16.mxu0 0
      %616 = vmatpush1.bf16.msra.mxu0 0
      %617 = vmatprep.subr.bf16.mxu0 0
      %618 = vmatpush1.bf16.msra.mxu0 0
      %619 = vmatprep.subr.bf16.mxu0 0
      %620 = vmatpush1.bf16.msra.mxu0 0
      %621 = vmatprep.subr.bf16.mxu0 0
      %622 = vmatpush1.bf16.msra.mxu0 0
      %623 = vmatprep.mubr.bf16.mxu0 0
      %624 = vmatmul.mubr.bf16.gmra.mrb[0].mxu0 %v589
      %v625 = vpop.f32.mrb[0].mxu0
      %v626 = vadd.f32 %v573, %v625
      %v627 = vpop.f32.mrb[0].mxu0
      %v628 = vpop.f32.mrb[0].mxu0
      %v629 = vpop.f32.mrb[0].mxu0
      %630 = vdwg.mxu0
      %v631 = vld [vmem:[%s534] sm:$0xf]
      %v632 = vld [vmem:[%s534 + $0x4] sm:$0xf]
      %v633 = vld [vmem:[%s534 + $0x8] sm:$0xf]
      %v634 = vld [vmem:[%s534 + $0xc] sm:$0xf]
      %v635 = vld [vmem:[%s537] sm:$0x1]
      %v637 = vlaneseq
      %v638 = vshrl.u32 %v637, 7
      %v639 = vsub.s32 0, %v638
      %v640 = vrot.slane %v635, %v639
      %v646 = vunpack.c.l.b16 %v631
      %v647 = vunpack.c.l.b16 %v632
      %v648 = vunpack.c.l.b16 %v633
      %v649 = vunpack.c.l.b16 %v634
      %v650 = vpack.c.b16 %v647, %v646
      %v651 = vpack.c.b16 %v649, %v648
      %654 = vmatprep.subr.bf16.mxu0 0
      %655 = vmatpush1.bf16.msra.mxu0 %v650
      %656 = vmatprep.subr.bf16.mxu0 0
      %657 = vmatpush1.bf16.msra.mxu0 %v651
      %658 = vmatprep.subr.bf16.mxu0 0
      %659 = vmatpush1.bf16.msra.mxu0 0
      %660 = vmatprep.subr.bf16.mxu0 0
      %661 = vmatpush1.bf16.msra.mxu0 0
      %662 = vmatprep.subr.bf16.mxu0 0
      %663 = vmatpush1.bf16.msra.mxu0 0
      %664 = vmatprep.subr.bf16.mxu0 0
      %665 = vmatpush1.bf16.msra.mxu0 0
      %666 = vmatprep.subr.bf16.mxu0 0
      %667 = vmatpush1.bf16.msra.mxu0 0
      %668 = vmatprep.subr.bf16.mxu0 0
      %669 = vmatpush1.bf16.msra.mxu0 0
      %670 = vmatprep.subr.bf16.mxu0 0
      %671 = vmatpush1.bf16.msra.mxu0 0
      %672 = vmatprep.subr.bf16.mxu0 0
      %673 = vmatpush1.bf16.msra.mxu0 0
      %674 = vmatprep.subr.bf16.mxu0 0
      %675 = vmatpush1.bf16.msra.mxu0 0
      %676 = vmatprep.subr.bf16.mxu0 0
      %677 = vmatpush1.bf16.msra.mxu0 0
      %678 = vmatprep.subr.bf16.mxu0 0
      %679 = vmatpush1.bf16.msra.mxu0 0
      %680 = vmatprep.subr.bf16.mxu0 0
      %681 = vmatpush1.bf16.msra.mxu0 0
      %682 = vmatprep.subr.bf16.mxu0 0
      %683 = vmatpush1.bf16.msra.mxu0 0
      %684 = vmatprep.subr.bf16.mxu0 0
      %685 = vmatpush1.bf16.msra.mxu0 0
      %686 = vmatprep.mubr.bf16.mxu0 0
      %687 = vmatmul.mubr.bf16.gmra.mrb[0].mxu0 %v589
      %v688 = vpop.f32.mrb[0].mxu0
      %v689 = vadd.f32 %v640, %v688
      %v690 = vpop.f32.mrb[0].mxu0
      %v691 = vpop.f32.mrb[0].mxu0
      %v692 = vpop.f32.mrb[0].mxu0
      %693 = vdwg.mxu0
      %v694 = vld [vmem:[%s542] sm:$0xf]
      %v695 = vld [vmem:[%s542 + $0x4] sm:$0xf]
      %v696 = vld [vmem:[%s542 + $0x8] sm:$0xf]
      %v697 = vld [vmem:[%s542 + $0xc] sm:$0xf]
      %v698 = vld [vmem:[%s545] sm:$0x1]
      %v700 = vlaneseq
      %v701 = vshrl.u32 %v700, 7
      %v702 = vsub.s32 0, %v701
      %v703 = vrot.slane %v698, %v702
      %v709 = vunpack.c.l.b16 %v694
      %v710 = vunpack.c.l.b16 %v695
      %v711 = vunpack.c.l.b16 %v696
      %v712 = vunpack.c.l.b16 %v697
      %v713 = vpack.c.b16 %v710, %v709
      %v714 = vpack.c.b16 %v712, %v711
      %717 = vmatprep.subr.bf16.mxu0 0
      %718 = vmatpush1.bf16.msra.mxu0 %v713
      %719 = vmatprep.subr.bf16.mxu0 0
      %720 = vmatpush1.bf16.msra.mxu0 %v714
      %721 = vmatprep.subr.bf16.mxu0 0
      %722 = vmatpush1.bf16.msra.mxu0 0
      %723 = vmatprep.subr.bf16.mxu0 0
      %724 = vmatpush1.bf16.msra.mxu0 0
      %725 = vmatprep.subr.bf16.mxu0 0
      %726 = vmatpush1.bf16.msra.mxu0 0
      %727 = vmatprep.subr.bf16.mxu0 0
      %728 = vmatpush1.bf16.msra.mxu0 0
      %729 = vmatprep.subr.bf16.mxu0 0
      %730 = vmatpush1.bf16.msra.mxu0 0
      %731 = vmatprep.subr.bf16.mxu0 0
      %732 = vmatpush1.bf16.msra.mxu0 0
      %733 = vmatprep.subr.bf16.mxu0 0
      %734 = vmatpush1.bf16.msra.mxu0 0
      %735 = vmatprep.subr.bf16.mxu0 0
      %736 = vmatpush1.bf16.msra.mxu0 0
      %737 = vmatprep.subr.bf16.mxu0 0
      %738 = vmatpush1.bf16.msra.mxu0 0
      %739 = vmatprep.subr.bf16.mxu0 0
      %740 = vmatpush1.bf16.msra.mxu0 0
      %741 = vmatprep.subr.bf16.mxu0 0
      %742 = vmatpush1.bf16.msra.mxu0 0
      %743 = vmatprep.subr.bf16.mxu0 0
      %744 = vmatpush1.bf16.msra.mxu0 0
      %745 = vmatprep.subr.bf16.mxu0 0
      %746 = vmatpush1.bf16.msra.mxu0 0
      %747 = vmatprep.subr.bf16.mxu0 0
      %748 = vmatpush1.bf16.msra.mxu0 0
      %749 = vmatprep.mubr.bf16.mxu0 0
      %750 = vmatmul.mubr.bf16.gmra.mrb[0].mxu0 %v589
      %v751 = vpop.f32.mrb[0].mxu0
      %v752 = vadd.f32 %v703, %v751
      %v753 = vpop.f32.mrb[0].mxu0
      %v754 = vpop.f32.mrb[0].mxu0
      %v755 = vpop.f32.mrb[0].mxu0
      %756 = vdwg.mxu0
      %v757 = vpack.c.bf16 %v626, %v626
      %v758 = vpack.c.bf16 %v689, %v689
      %vm759 = vcmask 64512
      %v761 = vsel %vm759, %v757, 0
      %v764 = vsel %vm759, %v758, 0
      %766 = vmatprep.subr.bf16.mxu0 0
      %767 = vmatpush1.bf16.xpose.msra.mxu0 %v764
      %768 = vmatprep.subr.bf16.mxu0 0
      %769 = vmatpush1.bf16.xpose.msra.mxu0 0
      %770 = vmatprep.subr.bf16.mxu0 0
      %771 = vmatpush1.bf16.xpose.msra.mxu0 0
      %772 = vmatprep.subr.bf16.mxu0 0
      %773 = vmatpush1.bf16.xpose.msra.mxu0 0
      %774 = vmatprep.subr.bf16.mxu0 0
      %775 = vmatpush1.bf16.xpose.msra.mxu0 0
      %776 = vmatprep.subr.bf16.mxu0 0
      %777 = vmatpush1.bf16.xpose.msra.mxu0 0
      %778 = vmatprep.subr.bf16.mxu0 0
      %779 = vmatpush1.bf16.xpose.msra.mxu0 0
      %780 = vmatprep.subr.bf16.mxu0 0
      %781 = vmatpush1.bf16.xpose.msra.mxu0 0
      %782 = vmatprep.subr.bf16.mxu0 0
      %783 = vmatpush1.bf16.xpose.msra.mxu0 0
      %784 = vmatprep.subr.bf16.mxu0 0
      %785 = vmatpush1.bf16.xpose.msra.mxu0 0
      %786 = vmatprep.subr.bf16.mxu0 0
      %787 = vmatpush1.bf16.xpose.msra.mxu0 0
      %788 = vmatprep.subr.bf16.mxu0 0
      %789 = vmatpush1.bf16.xpose.msra.mxu0 0
      %790 = vmatprep.subr.bf16.mxu0 0
      %791 = vmatpush1.bf16.xpose.msra.mxu0 0
      %792 = vmatprep.subr.bf16.mxu0 0
      %793 = vmatpush1.bf16.xpose.msra.mxu0 0
      %794 = vmatprep.subr.bf16.mxu0 0
      %795 = vmatpush1.bf16.xpose.msra.mxu0 0
      %796 = vmatprep.subr.bf16.mxu0 0
      %797 = vmatpush1.bf16.xpose.msra.mxu0 0
      %798 = vmatprep.mubr.bf16.mxu0 0
      %799 = vmatmul.mubr.bf16.gmra.mrb[0].mxu0 %v761
      %v800 = vpop.f32.mrb[0].mxu0
      %v801 = vadd.f32 0.0, %v800
      %v802 = vpop.f32.mrb[0].mxu0
      %v803 = vpop.f32.mrb[0].mxu0
      %v804 = vpop.f32.mrb[0].mxu0
      %805 = vdwg.mxu0
      %v806 = vmul.f32 %v801, 0.35355338
      %v808 = vlaneseq
      %v809 = vshrl.u32 %v808, 7
      %v810 = vsub.s32 0, %v809
      %v811 = vrot.slane %v563, %v810
      %v813 = vadd.f32 %v806, %v811
      %v814 = vsel %vm759, %v813, -inf
      %815 = vmax.xlane.f32.xlu0 %v814
      %v816 = vpop.xlane.xlu0 %815
      %v817 = vsub.f32 %v813, %v816
      %v818 = vmul.f32 %v817, 1.442695
      %v819 = vpow.pop %v818
      %v820 = vsel %vm759, %v819, 0.0
      %821 = vadd.xlane.f32.xlu0 %v820
      %v822 = vpop.xlane.xlu0 %821
      %v823 = vrcp.pop %v822
      %v824 = vmul.f32 %v819, %v823
      %v825 = vpack.c.bf16 %v824, %v824
      %v826 = vpack.c.bf16 %v752, %v752
      %v828 = vsel %vm759, %v825, 0
      %vm830 = vcmask 1043456
      %v832 = vsel %vm830, %v826, 0
      %834 = vmatprep.subr.bf16.mxu0 0
      %835 = vmatpush1.bf16.msra.mxu0 %v832
      %836 = vmatprep.subr.bf16.mxu0 0
      %837 = vmatpush1.bf16.msra.mxu0 0
      %838 = vmatprep.subr.bf16.mxu0 0
      %839 = vmatpush1.bf16.msra.mxu0 0
      %840 = vmatprep.subr.bf16.mxu0 0
      %841 = vmatpush1.bf16.msra.mxu0 0
      %842 = vmatprep.subr.bf16.mxu0 0
      %843 = vmatpush1.bf16.msra.mxu0 0
      %844 = vmatprep.subr.bf16.mxu0 0
      %845 = vmatpush1.bf16.msra.mxu0 0
      %846 = vmatprep.subr.bf16.mxu0 0
      %847 = vmatpush1.bf16.msra.mxu0 0
      %848 = vmatprep.subr.bf16.mxu0 0
      %849 = vmatpush1.bf16.msra.mxu0 0
      %850 = vmatprep.subr.bf16.mxu0 0
      %851 = vmatpush1.bf16.msra.mxu0 0
      %852 = vmatprep.subr.bf16.mxu0 0
      %853 = vmatpush1.bf16.msra.mxu0 0
      %854 = vmatprep.subr.bf16.mxu0 0
      %855 = vmatpush1.bf16.msra.mxu0 0
      %856 = vmatprep.subr.bf16.mxu0 0
      %857 = vmatpush1.bf16.msra.mxu0 0
      %858 = vmatprep.subr.bf16.mxu0 0
      %859 = vmatpush1.bf16.msra.mxu0 0
      %860 = vmatprep.subr.bf16.mxu0 0
      %861 = vmatpush1.bf16.msra.mxu0 0
      %862 = vmatprep.subr.bf16.mxu0 0
      %863 = vmatpush1.bf16.msra.mxu0 0
      %864 = vmatprep.subr.bf16.mxu0 0
      %865 = vmatpush1.bf16.msra.mxu0 0
      %866 = vmatprep.mubr.bf16.mxu0 0
      %867 = vmatmul.mubr.bf16.gmra.mrb[0].mxu0 %v828
      %v868 = vpop.f32.mrb[0].mxu0
      %v869 = vadd.f32 0.0, %v868
      %v870 = vpop.f32.mrb[0].mxu0
      %v871 = vpop.f32.mrb[0].mxu0
      %v872 = vpop.f32.mrb[0].mxu0
      %873 = vdwg.mxu0
      %v874 = vld [vmem:[#allocation2] sm:$0xff]
      %v875 = vpack.c.bf16 %v869, %v869
      %v876 = vld [vmem:[%s549] sm:$0xf]
      %v878 = vsel %vm759, %v875, 0
      %v881 = vsel %vm830, %v876, 0
      %883 = vmatprep.subr.bf16.mxu0 0
      %884 = vmatpush1.bf16.msra.mxu0 %v881
      %885 = vmatprep.subr.bf16.mxu0 0
      %886 = vmatpush1.bf16.msra.mxu0 0
      %887 = vmatprep.subr.bf16.mxu0 0
      %888 = vmatpush1.bf16.msra.mxu0 0
      %889 = vmatprep.subr.bf16.mxu0 0
      %890 = vmatpush1.bf16.msra.mxu0 0
      %891 = vmatprep.subr.bf16.mxu0 0
      %892 = vmatpush1.bf16.msra.mxu0 0
      %893 = vmatprep.subr.bf16.mxu0 0
      %894 = vmatpush1.bf16.msra.mxu0 0
      %895 = vmatprep.subr.bf16.mxu0 0
      %896 = vmatpush1.bf16.msra.mxu0 0
      %897 = vmatprep.subr.bf16.mxu0 0
      %898 = vmatpush1.bf16.msra.mxu0 0
      %899 = vmatprep.subr.bf16.mxu0 0
      %900 = vmatpush1.bf16.msra.mxu0 0
      %901 = vmatprep.subr.bf16.mxu0 0
      %902 = vmatpush1.bf16.msra.mxu0 0
      %903 = vmatprep.subr.bf16.mxu0 0
      %904 = vmatpush1.bf16.msra.mxu0 0
      %905 = vmatprep.subr.bf16.mxu0 0
      %906 = vmatpush1.bf16.msra.mxu0 0
      %907 = vmatprep.subr.bf16.mxu0 0
      %908 = vmatpush1.bf16.msra.mxu0 0
      %909 = vmatprep.subr.bf16.mxu0 0
      %910 = vmatpush1.bf16.msra.mxu0 0
      %911 = vmatprep.subr.bf16.mxu0 0
      %912 = vmatpush1.bf16.msra.mxu0 0
      %913 = vmatprep.subr.bf16.mxu0 0
      %914 = vmatpush1.bf16.msra.mxu0 0
      %915 = vmatprep.mubr.bf16.mxu0 0
      %916 = vmatmul.mubr.bf16.gmra.mrb[0].mxu0 %v878
      %v917 = vpop.f32.mrb[0].mxu0
      %v918 = vadd.f32 0.0, %v917
      %v919 = vpop.f32.mrb[0].mxu0
      %v920 = vpop.f32.mrb[0].mxu0
      %v921 = vpop.f32.mrb[0].mxu0
      %922 = vdwg.mxu0
      %v923 = vadd.f32 %v874, %v918
      %924 = vst.msk [vmem:[#allocation2] sm:$0xff] %vm587, %v923
      %p925 = scmp.eq.s32.totalorder %s28, 3
      // Predicated region
      $region73: #{combine_layer_forward.6} parent=67 // pred_check
        %p926 = pneg %p925
      $region74: #{combine_layer_forward.6} parent=67 // pred_check_branch
        %928 = sbr.rel (%p926) target = $region76
      $region75: #{combine_layer_forward.6} parent=67 // pred_region
        %v929 = vld [vmem:[#allocation2] sm:$0xff]
        %v930 = vld [vmem:[%s9] sm:$0x1]
        %v932 = vlaneseq
        %v933 = vshrl.u32 %v932, 7
        %v934 = vsub.s32 0, %v933
        %v935 = vrot.slane %v930, %v934
        %v937 = vadd.f32 %v929, %v935
        %v938 = vld [vmem:[%s518] sm:$0xff]
        %v939 = vadd.f32 %v937, %v938
        %v940 = vld [vmem:[%s10] sm:$0x1]
        %v941 = vld [vmem:[%s11] sm:$0x1]
        %v942 = vsel %vm587, %v939, 0.0
        %943 = vadd.xlane.f32.xlu0 %v942
        %v944 = vpop.xlane.xlu0 %943
        %v945 = vrcp.pop 32.0
        %v946 = vmul.f32 %v944, %v945
        %v947 = vsub.f32 %v939, %v946
        %v948 = vmul.f32 %v947, %v947
        %v949 = vsel %vm587, %v948, 0.0
        %950 = vadd.xlane.f32.xlu0 %v949
        %v951 = vpop.xlane.xlu0 %950
        %v952 = vmul.f32 %v951, %v945
        %v953 = vadd.f32 %v952, 1e-12
        %v954 = vrsqrt.pop %v953
        %v955 = vmul.f32 %v947, %v954
        %v957 = vlaneseq
        %v958 = vshrl.u32 %v957, 7
        %v959 = vsub.s32 0, %v958
        %v960 = vrot.slane %v940, %v959
        %v962 = vmul.f32 %v955, %v960
        %v964 = vlaneseq
        %v965 = vshrl.u32 %v964, 7
        %v966 = vsub.s32 0, %v965
        %v967 = vrot.slane %v941, %v966
        %v969 = vadd.f32 %v962, %v967
        %970 = vst.msk [vmem:[%s553] sm:$0xff] %vm587, %v969
      $region76: #{combine_layer_forward.6} parent=67 // pred_fallthru
        _
      %p971 = scmp.lt.s32.totalorder %s27, 1
      %s972 = scalar_select %p971, %s27, 1
      %s973 = smul.addr %s972, 8
      %s974 = scalar_lea.vmem %s12, %s973
      // Predicated region
      $region77: #{combine_layer_forward.6} parent=67 // pred_check
        %p975 = pneg %p350
      $region78: #{combine_layer_forward.6} parent=67 // pred_check_branch
        %977 = sbr.rel (%p975) target = $region80
      $region79: #{combine_layer_forward.6} parent=67 // pred_region
        _
      $region80: #{combine_layer_forward.6} parent=67 // pred_fallthru
        _
    $region68: #{combine_layer_forward.6} parent=5 // pred_fallthru
      _
    %p978 = scmp.le.s32.totalorder 2, %s18
    // Predicated region
    $region81: #{combine_layer_forward.6} parent=5 // pred_check
      %p979 = pneg %p978
    $region82: #{combine_layer_forward.6} parent=5 // pred_check_branch
      %981 = sbr.rel (%p979) target = $region84
    $region83: #{combine_layer_forward.6} parent=5 // pred_region
      %s982 = ssub.s32 %s18, 2
      // Predicated region
      $region85: #{combine_layer_forward.6} parent=83 // pred_check
        %p983 = pneg %p356
      $region86: #{combine_layer_forward.6} parent=83 // pred_check_branch
        %985 = sbr.rel (%p983) target = $region88
      $region87: #{combine_layer_forward.6} parent=83 // pred_region
        %p986 = scmp.lt.s32.totalorder %s29, 1
        %s987 = scalar_select %p986, %s29, 1
        %s988 = smul.addr %s987, 8
        %s989 = scalar_lea.vmem %s12, %s988
      $region88: #{combine_layer_forward.6} parent=83 // pred_fallthru
        _
    $region84: #{combine_layer_forward.6} parent=5 // pred_fallthru
      _
  $region6: #{combine_layer_forward.6} parent=0 // loop_footer
    %s22 = sadd.s32 1, %s18
  $region7: #{combine_layer_forward.6} parent=0 // loop_footer_branch
    %17 = sbr.rel target = $region3
  $region8: #{combine_layer_forward.6} parent=0 // loop_exit
    _

</llo_original>
